<compile_context>
chip_gen: v5e
topology: v5e:2x2
jax: 0.10.0
libtpu: 0.0.40
codegen_flags: <defaults>
</compile_context>

<pallas_src>
import jax
import jax.numpy as jnp
from jax.experimental import pallas as pl
from jax.experimental.pallas import tpu as pltpu

IN_FEATURES = 784
H1, H2 = 256, 128
H3_PAD = 128          # 64  -> 128 (lane-dense hidden tail)
OUT_PAD = 128         # 10  -> 128 (lane-dense logits / output store)
N_CLASSES = 10
NEG_MASK = -1e30      # baked into b4's pad lanes; Python float (not captured)


def _round_up(n, m):
    return ((n + m - 1) // m) * m


def mlp_kernel(x_ref,
               w1_ref, b1_ref,
               w2_ref, b2_ref,
               w3_ref, b3_ref,
               w4_ref, b4_ref,
               out_ref):
    """Full MLP forward for one batch tile, all layers fused in-kernel."""
    x = x_ref[...].astype(jnp.bfloat16)                              # (TB, 784)

    # fc1 + ReLU   (dropout in eval mode == identity)
    h = jnp.dot(x, w1_ref[...], preferred_element_type=jnp.float32) + b1_ref[...]
    h = jnp.maximum(h, 0.0).astype(jnp.bfloat16)                     # (TB, 256)

    # fc2 + ReLU
    h = jnp.dot(h, w2_ref[...], preferred_element_type=jnp.float32) + b2_ref[...]
    h = jnp.maximum(h, 0.0).astype(jnp.bfloat16)                     # (TB, 128)

    # fc3 + ReLU   (columns 64..127 are zero-padded -> stay exactly 0)
    h = jnp.dot(h, w3_ref[...], preferred_element_type=jnp.float32) + b3_ref[...]
    h = jnp.maximum(h, 0.0).astype(jnp.bfloat16)                     # (TB, 128)

    # fc4 logits. Lanes 10..127: w4 pad columns are 0 and b4 pad lanes hold
    # -1e30, so padded logits are exactly -1e30 and drop out of the softmax.
    logits = jnp.dot(h, w4_ref[...], preferred_element_type=jnp.float32) + b4_ref[...]

    m = jnp.max(logits, axis=-1, keepdims=True)
    shifted = logits - m
    lse = jnp.log(jnp.sum(jnp.exp(shifted), axis=-1, keepdims=True))
    out_ref[...] = (shifted - lse).astype(out_ref.dtype)


def _pad_and_cast_params(params):
    """Lane-dense weights (bf16) / biases (f32); b4 pad lanes carry the class mask."""
    (w1, b1), (w2, b2), (w3, b3), (w4, b4) = params

    def padw(w, rows, cols):
        w = jnp.pad(w.astype(jnp.float32),
                    ((0, rows - w.shape[0]), (0, cols - w.shape[1])))
        return w.astype(jnp.bfloat16)

    def padb(b, cols, pad_value=0.0):
        b = b.reshape(1, -1).astype(jnp.float32)
        return jnp.pad(b, ((0, 0), (0, cols - b.shape[1])),
                       constant_values=pad_value)

    return (w1.astype(jnp.bfloat16),   padb(b1, H1),
            w2.astype(jnp.bfloat16),   padb(b2, H2),
            padw(w3, H2, H3_PAD),      padb(b3, H3_PAD),
            padw(w4, H3_PAD, OUT_PAD), padb(b4, OUT_PAD, pad_value=NEG_MASK))


def _choose_tile_b(B, tile_b):
    """MXU-aligned rows; guarantee >=2 grid steps when B is worth splitting."""
    tile_b = max(128, _round_up(tile_b, 128))
    tile_b = min(tile_b, _round_up(B, 128))
    if tile_b >= B:
        if B > 32:
            # split into >=2 steps so v7x's two TensorCores both get work
            tile_b = _round_up(pl.cdiv(B, 2), 16)
        else:
            tile_b = _round_up(max(B, 8), 8)
    return tile_b


def classifier_forward(x_nchw, params, *, tile_b=512):
    """x_nchw: (B, 1, 28, 28) float32. Returns (B, 10) log-probabilities."""
    B = x_nchw.shape[0]
    x = x_nchw.reshape(B, IN_FEATURES).astype(jnp.float32)

    tile_b = _choose_tile_b(B, tile_b)
    grid = (pl.cdiv(B, tile_b),)

    w1, b1, w2, b2, w3, b3, w4, b4 = _pad_and_cast_params(params)

    # Whole-array VMEM blocks with a constant block index: DMA'd once and kept
    # resident across the batch grid.
    def resident_spec(a):
        return pl.BlockSpec(a.shape, lambda i: (0, 0))

    out_padded = pl.pallas_call(
        mlp_kernel,
        out_shape=jax.ShapeDtypeStruct((B, OUT_PAD), jnp.float32),
        grid_spec=pltpu.PrefetchScalarGridSpec(
            num_scalar_prefetch=0,
            grid=grid,
            in_specs=[pl.BlockSpec((tile_b, IN_FEATURES), lambda i: (i, 0))]
                     + [resident_spec(a) for a in (w1, b1, w2, b2, w3, b3, w4, b4)],
            out_specs=pl.BlockSpec((tile_b, OUT_PAD), lambda i: (i, 0)),
        ),
        compiler_params=pltpu.CompilerParams(
            dimension_semantics=("parallel",)),
    )(x, w1, b1, w2, b2, w3, b3, w4, b4)

    return out_padded[:, :N_CLASSES]


def init_params(key):
    """Deterministic init. Weights stored as (in, out); biases as (1, out)."""
    dims = [(784, 256), (256, 128), (128, 64), (64, 10)]
    params = []
    for din, dout in dims:
        kw, kb, key = jax.random.split(key, 3)
        bound = 1.0 / jnp.sqrt(din)  # matches nn.Linear default uniform bound
        w = jax.random.uniform(kw, (din, dout), jnp.float32, -bound, bound)
        b = jax.random.uniform(kb, (1, dout), jnp.float32, -bound, bound)
        params.append((w, b))
    return params


def reference_forward(x_nchw, params):
    """Plain-JAX reference with the same bf16-operand / f32-accumulate math."""
    h = x_nchw.reshape(x_nchw.shape[0], -1).astype(jnp.bfloat16)
    for i, (w, b) in enumerate(params):
        h = jnp.dot(h, w.astype(jnp.bfloat16),
                    preferred_element_type=jnp.float32) + b.astype(jnp.float32)
        if i < 3:
            h = jnp.maximum(h, 0.0).astype(jnp.bfloat16)
    return jax.nn.log_softmax(h, axis=-1)


if __name__ == "__main__":
    key = jax.random.PRNGKey(0)
    kx, kp = jax.random.split(key)

    # Ragged batch (not a multiple of the tile) to exercise the partial edge
    # block; tile_b=128 gives a 2-step parallel grid (both TCs on v7x).
    B = 200
    x = jax.random.normal(kx, (B, 1, 28, 28), jnp.float32)  # NCHW like PyTorch
    params = init_params(kp)

    out = classifier_forward(x, params, tile_b=128)
    out = jax.block_until_ready(out)
    assert out.shape == (B, 10)

    # sanity: log_softmax rows sum (in prob space) to ~1 and are finite
    row_sums = jnp.exp(out).sum(axis=-1)
    assert bool(jnp.all(jnp.isfinite(out)))
    assert bool(jnp.all(jnp.abs(row_sums - 1.0) < 1e-3))

    # numerical check vs a plain-JAX reference using the same bf16 math
    ref = reference_forward(x, params)
    assert bool(jnp.all(jnp.abs(out - ref) < 2e-2)), \
        float(jnp.max(jnp.abs(out - ref)))

    print("KERNEL_OK")
</pallas_src>

<mosaic_0001>
module attributes {stable_mosaic.version = 11 : i64} {
  func.func @mlp_kernel(%arg0: i32, %arg1: memref<128x784xf32, #tpu.memory_space<vmem>>, %arg2: memref<784x256xbf16, #tpu.memory_space<vmem>>, %arg3: memref<1x256xf32, #tpu.memory_space<vmem>>, %arg4: memref<256x128xbf16, #tpu.memory_space<vmem>>, %arg5: memref<1x128xf32, #tpu.memory_space<vmem>>, %arg6: memref<128x128xbf16, #tpu.memory_space<vmem>>, %arg7: memref<1x128xf32, #tpu.memory_space<vmem>>, %arg8: memref<128x128xbf16, #tpu.memory_space<vmem>>, %arg9: memref<1x128xf32, #tpu.memory_space<vmem>>, %arg10: memref<128x128xf32, #tpu.memory_space<vmem>>) attributes {dimension_semantics = [#tpu.dimension_semantics<parallel>], iteration_bounds = array<i64: 2>, scalar_prefetch = 0 : i64, scratch_operands = 0 : i64, tpu.core_type = #tpu.core_type<tc>, window_params = [{transform_indices = @transform_0, window_bounds = array<i64: 128, 784>}, {pipeline_mode = #tpu.pipeline_mode<synchronous>, transform_indices = @transform_1, window_bounds = array<i64: 784, 256>}, {pipeline_mode = #tpu.pipeline_mode<synchronous>, transform_indices = @transform_2, window_bounds = array<i64: 1, 256>}, {pipeline_mode = #tpu.pipeline_mode<synchronous>, transform_indices = @transform_3, window_bounds = array<i64: 256, 128>}, {pipeline_mode = #tpu.pipeline_mode<synchronous>, transform_indices = @transform_4, window_bounds = array<i64: 1, 128>}, {pipeline_mode = #tpu.pipeline_mode<synchronous>, transform_indices = @transform_5, window_bounds = array<i64: 128, 128>}, {pipeline_mode = #tpu.pipeline_mode<synchronous>, transform_indices = @transform_6, window_bounds = array<i64: 1, 128>}, {pipeline_mode = #tpu.pipeline_mode<synchronous>, transform_indices = @transform_7, window_bounds = array<i64: 128, 128>}, {pipeline_mode = #tpu.pipeline_mode<synchronous>, transform_indices = @transform_8, window_bounds = array<i64: 1, 128>}, {transform_indices = @transform_9, window_bounds = array<i64: 128, 128>}]} {
    %c0 = arith.constant 0 : index
    %c0_0 = arith.constant 0 : index
    %0 = vector.load %arg1[%c0, %c0_0] : memref<128x784xf32, #tpu.memory_space<vmem>>, vector<128x784xf32>
    %1 = arith.truncf %0 : vector<128x784xf32> to vector<128x784xbf16>
    %c0_1 = arith.constant 0 : index
    %c0_2 = arith.constant 0 : index
    %2 = vector.load %arg2[%c0_1, %c0_2] : memref<784x256xbf16, #tpu.memory_space<vmem>>, vector<784x256xbf16>
    %cst = arith.constant dense<0.000000e+00> : vector<128x256xf32>
    %3 = tpu.matmul %1, %2, %cst {dimension_numbers = #tpu.dot_dimension_numbers<[1], [0], [0], [1], [0, 0, 1, 1], [], []>} : vector<128x784xbf16>, vector<784x256xbf16>, vector<128x256xf32> -> vector<128x256xf32>
    %c0_3 = arith.constant 0 : index
    %c0_4 = arith.constant 0 : index
    %4 = vector.load %arg3[%c0_3, %c0_4] : memref<1x256xf32, #tpu.memory_space<vmem>>, vector<1x256xf32>
    %5 = vector.broadcast %4 : vector<1x256xf32> to vector<128x256xf32>
    %6 = arith.addf %3, %5 : vector<128x256xf32>
    %cst_5 = arith.constant 0.000000e+00 : f32
    %7 = vector.broadcast %cst_5 : f32 to vector<128x256xf32>
    %8 = arith.maximumf %6, %7 : vector<128x256xf32>
    %9 = arith.truncf %8 : vector<128x256xf32> to vector<128x256xbf16>
    %c0_6 = arith.constant 0 : index
    %c0_7 = arith.constant 0 : index
    %10 = vector.load %arg4[%c0_6, %c0_7] : memref<256x128xbf16, #tpu.memory_space<vmem>>, vector<256x128xbf16>
    %cst_8 = arith.constant dense<0.000000e+00> : vector<128x128xf32>
    %11 = tpu.matmul %9, %10, %cst_8 {dimension_numbers = #tpu.dot_dimension_numbers<[1], [0], [0], [1], [0, 0, 1, 1], [], []>} : vector<128x256xbf16>, vector<256x128xbf16>, vector<128x128xf32> -> vector<128x128xf32>
    %c0_9 = arith.constant 0 : index
    %c0_10 = arith.constant 0 : index
    %12 = vector.load %arg5[%c0_9, %c0_10] : memref<1x128xf32, #tpu.memory_space<vmem>>, vector<1x128xf32>
    %13 = vector.broadcast %12 : vector<1x128xf32> to vector<128x128xf32>
    %14 = arith.addf %11, %13 : vector<128x128xf32>
    %cst_11 = arith.constant 0.000000e+00 : f32
    %15 = vector.broadcast %cst_11 : f32 to vector<128x128xf32>
    %16 = arith.maximumf %14, %15 : vector<128x128xf32>
    %17 = arith.truncf %16 : vector<128x128xf32> to vector<128x128xbf16>
    %c0_12 = arith.constant 0 : index
    %c0_13 = arith.constant 0 : index
    %18 = vector.load %arg6[%c0_12, %c0_13] : memref<128x128xbf16, #tpu.memory_space<vmem>>, vector<128x128xbf16>
    %cst_14 = arith.constant dense<0.000000e+00> : vector<128x128xf32>
    %19 = tpu.matmul %17, %18, %cst_14 {dimension_numbers = #tpu.dot_dimension_numbers<[1], [0], [0], [1], [0, 0, 1, 1], [], []>} : vector<128x128xbf16>, vector<128x128xbf16>, vector<128x128xf32> -> vector<128x128xf32>
    %c0_15 = arith.constant 0 : index
    %c0_16 = arith.constant 0 : index
    %20 = vector.load %arg7[%c0_15, %c0_16] : memref<1x128xf32, #tpu.memory_space<vmem>>, vector<1x128xf32>
    %21 = vector.broadcast %20 : vector<1x128xf32> to vector<128x128xf32>
    %22 = arith.addf %19, %21 : vector<128x128xf32>
    %cst_17 = arith.constant 0.000000e+00 : f32
    %23 = vector.broadcast %cst_17 : f32 to vector<128x128xf32>
    %24 = arith.maximumf %22, %23 : vector<128x128xf32>
    %25 = arith.truncf %24 : vector<128x128xf32> to vector<128x128xbf16>
    %c0_18 = arith.constant 0 : index
    %c0_19 = arith.constant 0 : index
    %26 = vector.load %arg8[%c0_18, %c0_19] : memref<128x128xbf16, #tpu.memory_space<vmem>>, vector<128x128xbf16>
    %cst_20 = arith.constant dense<0.000000e+00> : vector<128x128xf32>
    %27 = tpu.matmul %25, %26, %cst_20 {dimension_numbers = #tpu.dot_dimension_numbers<[1], [0], [0], [1], [0, 0, 1, 1], [], []>} : vector<128x128xbf16>, vector<128x128xbf16>, vector<128x128xf32> -> vector<128x128xf32>
    %c0_21 = arith.constant 0 : index
    %c0_22 = arith.constant 0 : index
    %28 = vector.load %arg9[%c0_21, %c0_22] : memref<1x128xf32, #tpu.memory_space<vmem>>, vector<1x128xf32>
    %29 = vector.broadcast %28 : vector<1x128xf32> to vector<128x128xf32>
    %30 = arith.addf %27, %29 : vector<128x128xf32>
    %cst_23 = arith.constant dense<0xFF800000> : vector<128xf32>
    %31 = vector.multi_reduction <maximumf>, %30, %cst_23 [1] : vector<128x128xf32> to vector<128xf32>
    %32 = vector.shape_cast %31 : vector<128xf32> to vector<128x1xf32>
    %33 = vector.broadcast %32 : vector<128x1xf32> to vector<128x128xf32>
    %34 = arith.subf %30, %33 : vector<128x128xf32>
    %35 = math.exp %34 : vector<128x128xf32>
    %cst_24 = arith.constant dense<0.000000e+00> : vector<128xf32>
    %36 = vector.multi_reduction <add>, %35, %cst_24 [1] : vector<128x128xf32> to vector<128xf32>
    %37 = vector.shape_cast %36 : vector<128xf32> to vector<128x1xf32>
    %38 = math.log %37 : vector<128x1xf32>
    %39 = vector.broadcast %38 : vector<128x1xf32> to vector<128x128xf32>
    %40 = arith.subf %34, %39 : vector<128x128xf32>
    %c0_25 = arith.constant 0 : index
    %c0_26 = arith.constant 0 : index
    %41 = vector.load %arg10[%c0_25, %c0_26] : memref<128x128xf32, #tpu.memory_space<vmem>>, vector<128x128xf32>
    tpu.vector_store %arg10[%c0_25, %c0_26], %40 {strides = array<i32>} : memref<128x128xf32, #tpu.memory_space<vmem>>, vector<128x128xf32>,
    return
  }
  func.func @transform_0(%arg0: i32) -> (i32, i32) {
    %c0_i32 = arith.constant 0 : i32
    %c0_i32_0 = arith.constant 0 : i32
    return %arg0, %c0_i32 : i32, i32
  }
  func.func @transform_1(%arg0: i32) -> (i32, i32) {
    %c0_i32 = arith.constant 0 : i32
    %c0_i32_0 = arith.constant 0 : i32
    %c0_i32_1 = arith.constant 0 : i32
    return %c0_i32, %c0_i32_0 : i32, i32
  }
  func.func @transform_2(%arg0: i32) -> (i32, i32) {
    %c0_i32 = arith.constant 0 : i32
    %c0_i32_0 = arith.constant 0 : i32
    %c0_i32_1 = arith.constant 0 : i32
    return %c0_i32, %c0_i32_0 : i32, i32
  }
  func.func @transform_3(%arg0: i32) -> (i32, i32) {
    %c0_i32 = arith.constant 0 : i32
    %c0_i32_0 = arith.constant 0 : i32
    %c0_i32_1 = arith.constant 0 : i32
    return %c0_i32, %c0_i32_0 : i32, i32
  }
  func.func @transform_4(%arg0: i32) -> (i32, i32) {
    %c0_i32 = arith.constant 0 : i32
    %c0_i32_0 = arith.constant 0 : i32
    %c0_i32_1 = arith.constant 0 : i32
    return %c0_i32, %c0_i32_0 : i32, i32
  }
  func.func @transform_5(%arg0: i32) -> (i32, i32) {
    %c0_i32 = arith.constant 0 : i32
    %c0_i32_0 = arith.constant 0 : i32
    %c0_i32_1 = arith.constant 0 : i32
    return %c0_i32, %c0_i32_0 : i32, i32
  }
  func.func @transform_6(%arg0: i32) -> (i32, i32) {
    %c0_i32 = arith.constant 0 : i32
    %c0_i32_0 = arith.constant 0 : i32
    %c0_i32_1 = arith.constant 0 : i32
    return %c0_i32, %c0_i32_0 : i32, i32
  }
  func.func @transform_7(%arg0: i32) -> (i32, i32) {
    %c0_i32 = arith.constant 0 : i32
    %c0_i32_0 = arith.constant 0 : i32
    %c0_i32_1 = arith.constant 0 : i32
    return %c0_i32, %c0_i32_0 : i32, i32
  }
  func.func @transform_8(%arg0: i32) -> (i32, i32) {
    %c0_i32 = arith.constant 0 : i32
    %c0_i32_0 = arith.constant 0 : i32
    %c0_i32_1 = arith.constant 0 : i32
    return %c0_i32, %c0_i32_0 : i32, i32
  }
  func.func @transform_9(%arg0: i32) -> (i32, i32) {
    %c0_i32 = arith.constant 0 : i32
    %c0_i32_0 = arith.constant 0 : i32
    return %arg0, %c0_i32 : i32, i32
  }
}

</mosaic_0001>

<llo_original>
// kernel: tpu_custom_call.1
$region0: #{tpu_custom_call.1}
  #allocation0 [shape = 'u32[]', space=smem, size = 0x4, offset = 0x4, fixed_abs, tag = 'smem constant byte address 0x4 - core index']
  #allocation1 [shape = 'u32[72,128]{1,0:T(1,128)}', space=vmem, size = 0x9000, scoped, tag = 'internal scratch']
  %s0 = inlined_call_operand.hbm [shape: f32[200,784], index: 0, kind: input, shape index: {}]
  %s1 = inlined_call_operand.hbm [shape: bf16[784,256], index: 1, kind: input, shape index: {}]
  %s2 = inlined_call_operand.hbm [shape: f32[1,256], index: 2, kind: input, shape index: {}]
  %s3 = inlined_call_operand.hbm [shape: bf16[256,128], index: 3, kind: input, shape index: {}]
  %s4 = inlined_call_operand.vmem [shape: f32[1,128], index: 4, kind: input, shape index: {}]
  %s5 = inlined_call_operand.hbm [shape: bf16[128,128], index: 5, kind: input, shape index: {}]
  %s6 = inlined_call_operand.vmem [shape: f32[1,128], index: 6, kind: input, shape index: {}]
  %s7 = inlined_call_operand.hbm [shape: bf16[128,128], index: 7, kind: input, shape index: {}]
  %s8 = inlined_call_operand.vmem [shape: f32[1,128], index: 8, kind: input, shape index: {}]
  %s9 = inlined_call_operand.hbm [shape: f32[200,128], index: 9, kind: output, shape index: {}]
  %s10 = sld [smem:[#allocation0]]
  $region93: #{tpu_custom_call.1} parent=0
    _
  %s12 = ssub.s32 1, %s10
  %s13 = scalar_select 0, %s12, %s10
  $region1: #{tpu_custom_call.1} parent=0
    #allocation2 [shape = 'u8[917504]{0}', space=vmem, size = 0xe0000, scoped, tag = 'input window, operand 0']
    #allocation3 [shape = 's32[2]{0}', space=sflag, size = 0x8, scoped, tag = 'scoped memory for tpu_custom_call.1']
    #allocation4 [shape = 's32[2]{0}', space=sflag, size = 0x8, scoped, tag = 'scoped memory for tpu_custom_call.1']
    #allocation5 [shape = 'u8[401408]{0}', space=vmem, size = 0x62000, scoped, tag = 'input window, operand 1, single buffered']
    #allocation6 [shape = 's32[1]{0}', space=sflag, size = 0x4, scoped, tag = 'scoped memory for tpu_custom_call.1']
    #allocation7 [shape = 'u8[1024]{0}', space=vmem, size = 0x400, scoped, tag = 'input window, operand 2, single buffered']
    #allocation8 [shape = 'u8[65536]{0}', space=vmem, size = 0x10000, scoped, tag = 'input window, operand 3, single buffered']
    #allocation9 [shape = 's32[1]{0}', space=sflag, size = 0x4, scoped, tag = 'scoped memory for tpu_custom_call.1']
    #allocation10 [shape = 'u8[32768]{0}', space=vmem, size = 0x8000, scoped, tag = 'input window, operand 5, single buffered']
    #allocation11 [shape = 'u8[32768]{0}', space=vmem, size = 0x8000, scoped, tag = 'input window, operand 7, single buffered']
    #allocation12 [shape = 's32[1]{0}', space=sflag, size = 0x4, scoped, tag = 'scoped memory for tpu_custom_call.1']
    #allocation13 [shape = 'u8[131072]{0}', space=vmem, size = 0x20000, scoped, tag = 'output window, operand 0']
    %14 = vsyncpa [#allocation3], 0
    %s15 = scalar_lea.sflag [#allocation3], 1
    %16 = vsyncpa %s15, 0
    %17 = vsyncpa [#allocation6], 0
    %18 = vsyncpa [#allocation9], 0
    %19 = vsyncpa [#allocation12], 0
    %20 = vsyncpa [#allocation4], 0
    %s21 = scalar_lea.sflag [#allocation4], 1
    %22 = vsyncpa %s21, 0
    loop: start=0, step=1, limit=4
    $region2: #{tpu_custom_call.1} parent=1 // loop_pre_header
      _
    $region3: #{tpu_custom_call.1} parent=1 // loop_header
      %s24 = sphi 0, %s28
      %p25 = scmp.ge.s32.totalorder %s24, 4
      %s34 = sphi 0, %s36
      %s37 = sphi 0, %s34
      %s38 = sphi 0, %s37
      %s54 = sphi 0, %s38
      %s58 = sphi 0, %s58
      %s60 = sphi 0, %s58
      %s61 = sphi 0, %s60
      %s75 = sphi 0, %s61
      %s79 = sphi 0, %s79
      %s81 = sphi 0, %s79
      %s82 = sphi 0, %s81
      %s96 = sphi 0, %s82
      %s100 = sphi 0, %s100
      %s102 = sphi 0, %s100
      %s103 = sphi 0, %s102
      %s117 = sphi 0, %s103
      %s121 = sphi 0, %s121
      %s123 = sphi 0, %s121
      %s124 = sphi 0, %s123
      %s138 = sphi 0, %s124
      %s142 = sphi 0, %s142
      %s144 = sphi 0, %s142
      %s145 = sphi 0, %s144
      %s159 = sphi 0, %s145
      %s163 = sphi 0, %s163
      %s165 = sphi 0, %s163
      %s166 = sphi 0, %s165
      %s180 = sphi 0, %s166
      %s184 = sphi 0, %s184
      %s186 = sphi 0, %s184
      %s187 = sphi 0, %s186
      %s201 = sphi 0, %s187
      %s205 = sphi 0, %s205
      %s207 = sphi 0, %s205
      %s208 = sphi 0, %s207
      %s222 = sphi 0, %s208
      %s228 = sphi 0, %s230
      %s231 = sphi 0, %s228
      %s232 = sphi 0, %s231
      %s248 = sphi 0, %s232
    $region4: #{tpu_custom_call.1} parent=1 // loop_header_branch
      %27 = sbr.rel (%p25) target = $region8
    $region5: #{tpu_custom_call.1} parent=1 // loop_body
      %s29 = ssub.s32 %s24, 1
      %s30 = ssub.s32 %s24, 2
      %s31 = sadd.s32 %s24, 1
      %s32 = ssub.s32 %s24, %s31
      %p33 = scmp.eq.s32.totalorder %s32, 0
      %s35 = sadd.s32 %s34, 1
      %s36 = scalar_select %p33, %s34, %s35
      %p39 = pneg %p33
      %p40 = scmp.eq.s32.totalorder %s24, 1
      %p41 = por %p39, %p40
      %p42 = scmp.ne.s32.totalorder %s34, %s37
      %p43 = scmp.eq.s32.totalorder %s24, 0
      %p44 = por %p42, %p43
      %p45 = scmp.ne.s32.totalorder %s34, %s37
      %p46 = scmp.eq.s32.totalorder %s29, 1
      %p47 = por %p45, %p46
      %p48 = scmp.ne.s32.totalorder %s37, %s38
      %p49 = scmp.eq.s32.totalorder %s29, 0
      %p50 = por %p48, %p49
      %p51 = scmp.ne.s32.totalorder %s37, %s38
      %p52 = scmp.eq.s32.totalorder %s30, 1
      %p53 = por %p51, %p52
      %p55 = scmp.ne.s32.totalorder %s38, %s54
      %p56 = scmp.eq.s32.totalorder %s30, 0
      %p57 = por %p55, %p56
      %s59 = sadd.s32 %s58, 1
      %p62 = scmp.eq.s32.totalorder %s24, 1
      %p63 = scmp.ne.s32.totalorder %s58, %s60
      %p64 = scmp.eq.s32.totalorder %s24, 0
      %p65 = por %p63, %p64
      %p66 = scmp.ne.s32.totalorder %s58, %s60
      %p67 = scmp.eq.s32.totalorder %s29, 1
      %p68 = por %p66, %p67
      %p69 = scmp.ne.s32.totalorder %s60, %s61
      %p70 = scmp.eq.s32.totalorder %s29, 0
      %p71 = por %p69, %p70
      %p72 = scmp.ne.s32.totalorder %s60, %s61
      %p73 = scmp.eq.s32.totalorder %s30, 1
      %p74 = por %p72, %p73
      %p76 = scmp.ne.s32.totalorder %s61, %s75
      %p77 = scmp.eq.s32.totalorder %s30, 0
      %p78 = por %p76, %p77
      %s80 = sadd.s32 %s79, 1
      %p83 = scmp.eq.s32.totalorder %s24, 1
      %p84 = scmp.ne.s32.totalorder %s79, %s81
      %p85 = scmp.eq.s32.totalorder %s24, 0
      %p86 = por %p84, %p85
      %p87 = scmp.ne.s32.totalorder %s79, %s81
      %p88 = scmp.eq.s32.totalorder %s29, 1
      %p89 = por %p87, %p88
      %p90 = scmp.ne.s32.totalorder %s81, %s82
      %p91 = scmp.eq.s32.totalorder %s29, 0
      %p92 = por %p90, %p91
      %p93 = scmp.ne.s32.totalorder %s81, %s82
      %p94 = scmp.eq.s32.totalorder %s30, 1
      %p95 = por %p93, %p94
      %p97 = scmp.ne.s32.totalorder %s82, %s96
      %p98 = scmp.eq.s32.totalorder %s30, 0
      %p99 = por %p97, %p98
      %s101 = sadd.s32 %s100, 1
      %p104 = scmp.eq.s32.totalorder %s24, 1
      %p105 = scmp.ne.s32.totalorder %s100, %s102
      %p106 = scmp.eq.s32.totalorder %s24, 0
      %p107 = por %p105, %p106
      %p108 = scmp.ne.s32.totalorder %s100, %s102
      %p109 = scmp.eq.s32.totalorder %s29, 1
      %p110 = por %p108, %p109
      %p111 = scmp.ne.s32.totalorder %s102, %s103
      %p112 = scmp.eq.s32.totalorder %s29, 0
      %p113 = por %p111, %p112
      %p114 = scmp.ne.s32.totalorder %s102, %s103
      %p115 = scmp.eq.s32.totalorder %s30, 1
      %p116 = por %p114, %p115
      %p118 = scmp.ne.s32.totalorder %s103, %s117
      %p119 = scmp.eq.s32.totalorder %s30, 0
      %p120 = por %p118, %p119
      %s122 = sadd.s32 %s121, 1
      %p125 = scmp.eq.s32.totalorder %s24, 1
      %p126 = scmp.ne.s32.totalorder %s121, %s123
      %p127 = scmp.eq.s32.totalorder %s24, 0
      %p128 = por %p126, %p127
      %p129 = scmp.ne.s32.totalorder %s121, %s123
      %p130 = scmp.eq.s32.totalorder %s29, 1
      %p131 = por %p129, %p130
      %p132 = scmp.ne.s32.totalorder %s123, %s124
      %p133 = scmp.eq.s32.totalorder %s29, 0
      %p134 = por %p132, %p133
      %p135 = scmp.ne.s32.totalorder %s123, %s124
      %p136 = scmp.eq.s32.totalorder %s30, 1
      %p137 = por %p135, %p136
      %p139 = scmp.ne.s32.totalorder %s124, %s138
      %p140 = scmp.eq.s32.totalorder %s30, 0
      %p141 = por %p139, %p140
      %s143 = sadd.s32 %s142, 1
      %p146 = scmp.eq.s32.totalorder %s24, 1
      %p147 = scmp.ne.s32.totalorder %s142, %s144
      %p148 = scmp.eq.s32.totalorder %s24, 0
      %p149 = por %p147, %p148
      %p150 = scmp.ne.s32.totalorder %s142, %s144
      %p151 = scmp.eq.s32.totalorder %s29, 1
      %p152 = por %p150, %p151
      %p153 = scmp.ne.s32.totalorder %s144, %s145
      %p154 = scmp.eq.s32.totalorder %s29, 0
      %p155 = por %p153, %p154
      %p156 = scmp.ne.s32.totalorder %s144, %s145
      %p157 = scmp.eq.s32.totalorder %s30, 1
      %p158 = por %p156, %p157
      %p160 = scmp.ne.s32.totalorder %s145, %s159
      %p161 = scmp.eq.s32.totalorder %s30, 0
      %p162 = por %p160, %p161
      %s164 = sadd.s32 %s163, 1
      %p167 = scmp.eq.s32.totalorder %s24, 1
      %p168 = scmp.ne.s32.totalorder %s163, %s165
      %p169 = scmp.eq.s32.totalorder %s24, 0
      %p170 = por %p168, %p169
      %p171 = scmp.ne.s32.totalorder %s163, %s165
      %p172 = scmp.eq.s32.totalorder %s29, 1
      %p173 = por %p171, %p172
      %p174 = scmp.ne.s32.totalorder %s165, %s166
      %p175 = scmp.eq.s32.totalorder %s29, 0
      %p176 = por %p174, %p175
      %p177 = scmp.ne.s32.totalorder %s165, %s166
      %p178 = scmp.eq.s32.totalorder %s30, 1
      %p179 = por %p177, %p178
      %p181 = scmp.ne.s32.totalorder %s166, %s180
      %p182 = scmp.eq.s32.totalorder %s30, 0
      %p183 = por %p181, %p182
      %s185 = sadd.s32 %s184, 1
      %p188 = scmp.eq.s32.totalorder %s24, 1
      %p189 = scmp.ne.s32.totalorder %s184, %s186
      %p190 = scmp.eq.s32.totalorder %s24, 0
      %p191 = por %p189, %p190
      %p192 = scmp.ne.s32.totalorder %s184, %s186
      %p193 = scmp.eq.s32.totalorder %s29, 1
      %p194 = por %p192, %p193
      %p195 = scmp.ne.s32.totalorder %s186, %s187
      %p196 = scmp.eq.s32.totalorder %s29, 0
      %p197 = por %p195, %p196
      %p198 = scmp.ne.s32.totalorder %s186, %s187
      %p199 = scmp.eq.s32.totalorder %s30, 1
      %p200 = por %p198, %p199
      %p202 = scmp.ne.s32.totalorder %s187, %s201
      %p203 = scmp.eq.s32.totalorder %s30, 0
      %p204 = por %p202, %p203
      %s206 = sadd.s32 %s205, 1
      %p209 = scmp.eq.s32.totalorder %s24, 1
      %p210 = scmp.ne.s32.totalorder %s205, %s207
      %p211 = scmp.eq.s32.totalorder %s24, 0
      %p212 = por %p210, %p211
      %p213 = scmp.ne.s32.totalorder %s205, %s207
      %p214 = scmp.eq.s32.totalorder %s29, 1
      %p215 = por %p213, %p214
      %p216 = scmp.ne.s32.totalorder %s207, %s208
      %p217 = scmp.eq.s32.totalorder %s29, 0
      %p218 = por %p216, %p217
      %p219 = scmp.ne.s32.totalorder %s207, %s208
      %p220 = scmp.eq.s32.totalorder %s30, 1
      %p221 = por %p219, %p220
      %p223 = scmp.ne.s32.totalorder %s208, %s222
      %p224 = scmp.eq.s32.totalorder %s30, 0
      %p225 = por %p223, %p224
      %s226 = ssub.s32 %s24, %s31
      %p227 = scmp.eq.s32.totalorder %s226, 0
      %s229 = sadd.s32 %s228, 1
      %s230 = scalar_select %p227, %s228, %s229
      %p233 = pneg %p227
      %p234 = scmp.eq.s32.totalorder %s24, 1
      %p235 = por %p233, %p234
      %p236 = scmp.ne.s32.totalorder %s228, %s231
      %p237 = scmp.eq.s32.totalorder %s24, 0
      %p238 = por %p236, %p237
      %p239 = scmp.ne.s32.totalorder %s228, %s231
      %p240 = scmp.eq.s32.totalorder %s29, 1
      %p241 = por %p239, %p240
      %p242 = scmp.ne.s32.totalorder %s231, %s232
      %p243 = scmp.eq.s32.totalorder %s29, 0
      %p244 = por %p242, %p243
      %p245 = scmp.ne.s32.totalorder %s231, %s232
      %p246 = scmp.eq.s32.totalorder %s30, 1
      %p247 = por %p245, %p246
      %p249 = scmp.ne.s32.totalorder %s232, %s248
      %p250 = scmp.eq.s32.totalorder %s30, 0
      %p251 = por %p249, %p250
      %p252 = scmp.le.s32.totalorder 1, %s24
      %p253 = scmp.lt.s32.totalorder %s24, 3
      %p254 = pnand %p252, %p253
      %p255 = pneg %p254
      // Predicated region
      $region9: #{tpu_custom_call.1} parent=5 // pred_check
        _
      $region10: #{tpu_custom_call.1} parent=5 // pred_check_branch
        %257 = sbr.rel (%p254) target = $region12
      $region11: #{tpu_custom_call.1} parent=5 // pred_region
        %s258 = ssub.s32 %s24, 1
        // Predicated region
        $region13: #{tpu_custom_call.1} parent=11 // pred_check
          %p259 = pneg %p71
        $region14: #{tpu_custom_call.1} parent=11 // pred_check_branch
          %261 = sbr.rel (%p259) target = $region16
        $region15: #{tpu_custom_call.1} parent=11 // pred_region
          %263 = vsyncadd [#allocation6], 0
          %s264 = sshll.u32 %s1, 4
          %s265 = int_to_ptr.hbm [resolvable:$true] %s264
          %s266 = sshll.u32 [#allocation5], 4
          %s267 = int_to_ptr.vmem [resolvable:$true] %s266
          %272 = dma.hbm_to_vmem [thread:$0]  %s265, 12544, %s267, [#allocation6], 128, 128, 8
        $region16: #{tpu_custom_call.1} parent=11 // pred_fallthru
          _
        // Predicated region
        $region17: #{tpu_custom_call.1} parent=11 // pred_check
          %p273 = pneg %p92
        $region18: #{tpu_custom_call.1} parent=11 // pred_check_branch
          %275 = sbr.rel (%p273) target = $region20
        $region19: #{tpu_custom_call.1} parent=11 // pred_region
          %277 = vsyncadd [#allocation6], 0
          %s279 = sshll.u32 %s2, 4
          %s280 = int_to_ptr.hbm [resolvable:$true] %s279
          %s281 = sshll.u32 [#allocation7], 4
          %s282 = int_to_ptr.vmem [resolvable:$true] %s281
          %284 = dma.hbm_to_vmem [thread:$0]  %s280, 32, %s282, [#allocation6]
        $region20: #{tpu_custom_call.1} parent=11 // pred_fallthru
          _
        // Predicated region
        $region21: #{tpu_custom_call.1} parent=11 // pred_check
          %p285 = pneg %p113
        $region22: #{tpu_custom_call.1} parent=11 // pred_check_branch
          %287 = sbr.rel (%p285) target = $region24
        $region23: #{tpu_custom_call.1} parent=11 // pred_region
          %289 = vsyncadd [#allocation9], 0
          %s290 = sshll.u32 %s3, 4
          %s291 = int_to_ptr.hbm [resolvable:$true] %s290
          %s292 = sshll.u32 [#allocation8], 4
          %s293 = int_to_ptr.vmem [resolvable:$true] %s292
          %298 = dma.hbm_to_vmem [thread:$0]  %s291, 2048, %s293, [#allocation9], 64, 64, 4
        $region24: #{tpu_custom_call.1} parent=11 // pred_fallthru
          _
        // Predicated region
        $region25: #{tpu_custom_call.1} parent=11 // pred_check
          %p299 = pneg %p134
        $region26: #{tpu_custom_call.1} parent=11 // pred_check_branch
          %301 = sbr.rel (%p299) target = $region28
        $region27: #{tpu_custom_call.1} parent=11 // pred_region
          _
        $region28: #{tpu_custom_call.1} parent=11 // pred_fallthru
          _
        // Predicated region
        $region29: #{tpu_custom_call.1} parent=11 // pred_check
          %p302 = pneg %p155
        $region30: #{tpu_custom_call.1} parent=11 // pred_check_branch
          %304 = sbr.rel (%p302) target = $region32
        $region31: #{tpu_custom_call.1} parent=11 // pred_region
          %306 = vsyncadd [#allocation9], 0
          %s307 = sshll.u32 %s5, 4
          %s308 = int_to_ptr.hbm [resolvable:$true] %s307
          %s309 = sshll.u32 [#allocation10], 4
          %s310 = int_to_ptr.vmem [resolvable:$true] %s309
          %315 = dma.hbm_to_vmem [thread:$0]  %s308, 1024, %s310, [#allocation9], 64, 64, 4
        $region32: #{tpu_custom_call.1} parent=11 // pred_fallthru
          _
        // Predicated region
        $region33: #{tpu_custom_call.1} parent=11 // pred_check
          %p316 = pneg %p176
        $region34: #{tpu_custom_call.1} parent=11 // pred_check_branch
          %318 = sbr.rel (%p316) target = $region36
        $region35: #{tpu_custom_call.1} parent=11 // pred_region
          _
        $region36: #{tpu_custom_call.1} parent=11 // pred_fallthru
          _
        // Predicated region
        $region37: #{tpu_custom_call.1} parent=11 // pred_check
          %p319 = pneg %p197
        $region38: #{tpu_custom_call.1} parent=11 // pred_check_branch
          %321 = sbr.rel (%p319) target = $region40
        $region39: #{tpu_custom_call.1} parent=11 // pred_region
          %323 = vsyncadd [#allocation12], 0
          %s324 = sshll.u32 %s7, 4
          %s325 = int_to_ptr.hbm [resolvable:$true] %s324
          %s326 = sshll.u32 [#allocation11], 4
          %s327 = int_to_ptr.vmem [resolvable:$true] %s326
          %332 = dma.hbm_to_vmem [thread:$0]  %s325, 1024, %s327, [#allocation12], 64, 64, 4
        $region40: #{tpu_custom_call.1} parent=11 // pred_fallthru
          _
        // Predicated region
        $region41: #{tpu_custom_call.1} parent=11 // pred_check
          %p333 = pneg %p218
        $region42: #{tpu_custom_call.1} parent=11 // pred_check_branch
          %335 = sbr.rel (%p333) target = $region44
        $region43: #{tpu_custom_call.1} parent=11 // pred_region
          _
        $region44: #{tpu_custom_call.1} parent=11 // pred_fallthru
          _
      $region12: #{tpu_custom_call.1} parent=5 // pred_fallthru
        _
      %p336 = scmp.lt.s32.totalorder %s24, 2
      // Predicated region
      $region45: #{tpu_custom_call.1} parent=5 // pred_check
        %p337 = pneg %p336
      $region46: #{tpu_custom_call.1} parent=5 // pred_check_branch
        %339 = sbr.rel (%p337) target = $region48
      $region47: #{tpu_custom_call.1} parent=5 // pred_region
        // Predicated region
        $region49: #{tpu_custom_call.1} parent=47 // pred_check
          %p340 = pneg %p44
        $region50: #{tpu_custom_call.1} parent=47 // pred_check_branch
          %342 = sbr.rel (%p340) target = $region52
        $region51: #{tpu_custom_call.1} parent=47 // pred_region
          %s343 = sand.u32 %s34, 1
          %s344 = scalar_lea.sflag [#allocation3], %s343
          %s345 = sand.u32 %s34, 1
          %s346 = smul.addr %s345, 896
          %s347 = scalar_lea.vmem [#allocation2], %s346
          %s348 = smul.u32 16, %s24
          %s349 = ssub.s32 25, %s348
          %p350 = scmp.lt.s32.totalorder %s349, 16
          %s351 = scalar_select %p350, %s349, 16
          %s352 = smul.u32 8, %s351
          %s353 = smul.u32 %s352, 7
          %s354 = ssub.s32 896, %s353
          %s355 = sshll.u32 %s354, 4
          %356 = vsyncadd %s344, %s355
          %p357 = scmp.ne.s32.totalorder 0, %s353
          %s358 = smul.addr %s348, 7
          %s359 = smul.addr %s358, 8
          %s360 = scalar_lea.hbm %s0, %s359
          %s361 = smul.u32 56, %s351
          %s362 = sshll.u32 %s360, 4
          %s363 = int_to_ptr.hbm [resolvable:$true] %s362
          %s364 = sshll.u32 %s347, 4
          %s365 = int_to_ptr.vmem [resolvable:$true] %s364
          %s366 = sshll.u32 %s361, 4
          %370 = dma.hbm_to_vmem [thread:$0]  (%p357), %s363, %s366, %s365, %s344, 896, 896, 56
        $region52: #{tpu_custom_call.1} parent=47 // pred_fallthru
          _
      $region48: #{tpu_custom_call.1} parent=5 // pred_fallthru
        _
      %p371 = scmp.le.s32.totalorder 1, %s24
      %p372 = scmp.lt.s32.totalorder %s24, 3
      %p373 = pnand %p371, %p372
      %p374 = pneg %p373
      // Predicated region
      $region53: #{tpu_custom_call.1} parent=5 // pred_check
        _
      $region54: #{tpu_custom_call.1} parent=5 // pred_check_branch
        %376 = sbr.rel (%p373) target = $region56
      $region55: #{tpu_custom_call.1} parent=5 // pred_region
        %s377 = ssub.s32 %s24, 1
        %s378 = sand.u32 %s37, 1
        %s379 = scalar_lea.sflag [#allocation3], %s378
        %s380 = sand.u32 %s37, 1
        %s381 = smul.addr %s380, 896
        %s382 = scalar_lea.vmem [#allocation2], %s381
        // Predicated region
        $region57: #{tpu_custom_call.1} parent=55 // pred_check
          %p383 = pneg %p50
        $region58: #{tpu_custom_call.1} parent=55 // pred_check_branch
          %385 = sbr.rel (%p383) target = $region60
        $region59: #{tpu_custom_call.1} parent=55 // pred_region
          %387 = dma.done %s379, 14336
        $region60: #{tpu_custom_call.1} parent=55 // pred_fallthru
          _
        // Predicated region
        $region61: #{tpu_custom_call.1} parent=55 // pred_check
          %p388 = pneg %p71
        $region62: #{tpu_custom_call.1} parent=55 // pred_check_branch
          %390 = sbr.rel (%p388) target = $region64
        $region63: #{tpu_custom_call.1} parent=55 // pred_region
          %392 = dma.done [#allocation6], 12544
        $region64: #{tpu_custom_call.1} parent=55 // pred_fallthru
          _
        // Predicated region
        $region65: #{tpu_custom_call.1} parent=55 // pred_check
          %p393 = pneg %p92
        $region66: #{tpu_custom_call.1} parent=55 // pred_check_branch
          %395 = sbr.rel (%p393) target = $region68
        $region67: #{tpu_custom_call.1} parent=55 // pred_region
          %397 = dma.done [#allocation6], 32
        $region68: #{tpu_custom_call.1} parent=55 // pred_fallthru
          _
        // Predicated region
        $region69: #{tpu_custom_call.1} parent=55 // pred_check
          %p398 = pneg %p113
        $region70: #{tpu_custom_call.1} parent=55 // pred_check_branch
          %400 = sbr.rel (%p398) target = $region72
        $region71: #{tpu_custom_call.1} parent=55 // pred_region
          %402 = dma.done [#allocation9], 2048
        $region72: #{tpu_custom_call.1} parent=55 // pred_fallthru
          _
        // Predicated region
        $region73: #{tpu_custom_call.1} parent=55 // pred_check
          %p403 = pneg %p155
        $region74: #{tpu_custom_call.1} parent=55 // pred_check_branch
          %405 = sbr.rel (%p403) target = $region76
        $region75: #{tpu_custom_call.1} parent=55 // pred_region
          %407 = dma.done [#allocation9], 1024
        $region76: #{tpu_custom_call.1} parent=55 // pred_fallthru
          _
        // Predicated region
        $region77: #{tpu_custom_call.1} parent=55 // pred_check
          %p408 = pneg %p197
        $region78: #{tpu_custom_call.1} parent=55 // pred_check_branch
          %410 = sbr.rel (%p408) target = $region80
        $region79: #{tpu_custom_call.1} parent=55 // pred_region
          %412 = dma.done [#allocation12], 1024
        $region80: #{tpu_custom_call.1} parent=55 // pred_fallthru
          _
        %s413 = sand.u32 %s37, 1
        %s414 = scalar_lea.sflag [#allocation3], %s413
        %s415 = sand.u32 %s37, 1
        %s416 = smul.addr %s415, 896
        %s417 = scalar_lea.vmem [#allocation2], %s416
        %p418 = pneg %p50
        %p419 = pneg %p47
        %p420 = pneg %p71
        %p421 = pneg %p68
        %p422 = pneg %p92
        %p423 = pneg %p89
        %p424 = pneg %p113
        %p425 = pneg %p110
        %p426 = pneg %p134
        %p427 = pneg %p131
        %p428 = pneg %p155
        %p429 = pneg %p152
        %p430 = pneg %p176
        %p431 = pneg %p173
        %p432 = pneg %p197
        %p433 = pneg %p194
        %p434 = pneg %p218
        %p435 = pneg %p215
        %p436 = pneg %p244
        %p437 = pneg %p241
        %s438 = sand.u32 %s231, 1
        %s439 = scalar_lea.sflag [#allocation4], %s438
        %s440 = sand.u32 %s231, 1
        %s441 = smul.addr %s440, 128
        %s442 = scalar_lea.vmem [#allocation13], %s441
        %s443 = smul.u32 16, %s29
        %s444 = ssub.s32 25, %s443
        %p445 = scmp.lt.s32.totalorder %s444, 16
        %s446 = scalar_select %p445, %s444, 16
        %s447 = smul.u32 8, %s446
        %s448 = smul.u32 %s447, 7
        %s449 = smul.u32 16, %s29
        %s450 = ssub.s32 25, %s449
        %p451 = scmp.lt.s32.totalorder %s450, 16
        %s452 = scalar_select %p451, %s450, 16
        %s453 = smul.u32 8, %s452
        %v455 = vld [vmem:[%s382] sm:$0xff]
        %v456 = vld [vmem:[%s382 + $0x8] sm:$0xff]
        %v457 = vld [vmem:[%s382 + $0x10] sm:$0xff]
        %v458 = vld [vmem:[%s382 + $0x18] sm:$0xff]
        %v459 = vld [vmem:[%s382 + $0x20] sm:$0xff]
        %v460 = vld [vmem:[%s382 + $0x28] sm:$0xff]
        %v461 = vld [vmem:[%s382 + $0x30] sm:$0xff]
        %v462 = vld [vmem:[%s382 + $0x38] sm:$0xff]
        %v463 = vld [vmem:[%s382 + $0x40] sm:$0xff]
        %v464 = vld [vmem:[%s382 + $0x48] sm:$0xff]
        %v465 = vld [vmem:[%s382 + $0x50] sm:$0xff]
        %v466 = vld [vmem:[%s382 + $0x58] sm:$0xff]
        %v467 = vld [vmem:[%s382 + $0x60] sm:$0xff]
        %v468 = vld [vmem:[%s382 + $0x68] sm:$0xff]
        %v469 = vld [vmem:[%s382 + $0x70] sm:$0xff]
        %v470 = vld [vmem:[%s382 + $0x78] sm:$0xff]
        %v471 = vld [vmem:[%s382 + $0x80] sm:$0xff]
        %v472 = vld [vmem:[%s382 + $0x88] sm:$0xff]
        %v473 = vld [vmem:[%s382 + $0x90] sm:$0xff]
        %v474 = vld [vmem:[%s382 + $0x98] sm:$0xff]
        %v475 = vld [vmem:[%s382 + $0xa0] sm:$0xff]
        %v476 = vld [vmem:[%s382 + $0xa8] sm:$0xff]
        %v477 = vld [vmem:[%s382 + $0xb0] sm:$0xff]
        %v478 = vld [vmem:[%s382 + $0xb8] sm:$0xff]
        %v479 = vld [vmem:[%s382 + $0xc0] sm:$0xff]
        %v480 = vld [vmem:[%s382 + $0xc8] sm:$0xff]
        %v481 = vld [vmem:[%s382 + $0xd0] sm:$0xff]
        %v482 = vld [vmem:[%s382 + $0xd8] sm:$0xff]
        %v483 = vld [vmem:[%s382 + $0xe0] sm:$0xff]
        %v484 = vld [vmem:[%s382 + $0xe8] sm:$0xff]
        %v485 = vld [vmem:[%s382 + $0xf0] sm:$0xff]
        %v486 = vld [vmem:[%s382 + $0xf8] sm:$0xff]
        %v487 = vld [vmem:[%s382 + $0x100] sm:$0xff]
        %v488 = vld [vmem:[%s382 + $0x108] sm:$0xff]
        %v489 = vld [vmem:[%s382 + $0x110] sm:$0xff]
        %v490 = vld [vmem:[%s382 + $0x118] sm:$0xff]
        %v491 = vld [vmem:[%s382 + $0x120] sm:$0xff]
        %v492 = vld [vmem:[%s382 + $0x128] sm:$0xff]
        %v493 = vld [vmem:[%s382 + $0x130] sm:$0xff]
        %v494 = vld [vmem:[%s382 + $0x138] sm:$0xff]
        %v495 = vld [vmem:[%s382 + $0x140] sm:$0xff]
        %v496 = vld [vmem:[%s382 + $0x148] sm:$0xff]
        %v497 = vld [vmem:[%s382 + $0x150] sm:$0xff]
        %v498 = vld [vmem:[%s382 + $0x158] sm:$0xff]
        %v499 = vld [vmem:[%s382 + $0x160] sm:$0xff]
        %v500 = vld [vmem:[%s382 + $0x168] sm:$0xff]
        %v501 = vld [vmem:[%s382 + $0x170] sm:$0xff]
        %v502 = vld [vmem:[%s382 + $0x178] sm:$0xff]
        %v503 = vld [vmem:[%s382 + $0x180] sm:$0xff]
        %v504 = vld [vmem:[%s382 + $0x188] sm:$0xff]
        %v505 = vld [vmem:[%s382 + $0x190] sm:$0xff]
        %v506 = vld [vmem:[%s382 + $0x198] sm:$0xff]
        %v507 = vld [vmem:[%s382 + $0x1a0] sm:$0xff]
        %v508 = vld [vmem:[%s382 + $0x1a8] sm:$0xff]
        %v509 = vld [vmem:[%s382 + $0x1b0] sm:$0xff]
        %v510 = vld [vmem:[%s382 + $0x1b8] sm:$0xff]
        %v511 = vld [vmem:[%s382 + $0x1c0] sm:$0xff]
        %v512 = vld [vmem:[%s382 + $0x1c8] sm:$0xff]
        %v513 = vld [vmem:[%s382 + $0x1d0] sm:$0xff]
        %v514 = vld [vmem:[%s382 + $0x1d8] sm:$0xff]
        %v515 = vld [vmem:[%s382 + $0x1e0] sm:$0xff]
        %v516 = vld [vmem:[%s382 + $0x1e8] sm:$0xff]
        %v517 = vld [vmem:[%s382 + $0x1f0] sm:$0xff]
        %v518 = vld [vmem:[%s382 + $0x1f8] sm:$0xff]
        %v519 = vld [vmem:[%s382 + $0x200] sm:$0xff]
        %v520 = vld [vmem:[%s382 + $0x208] sm:$0xff]
        %v521 = vld [vmem:[%s382 + $0x210] sm:$0xff]
        %v522 = vld [vmem:[%s382 + $0x218] sm:$0xff]
        %v523 = vld [vmem:[%s382 + $0x220] sm:$0xff]
        %v524 = vld [vmem:[%s382 + $0x228] sm:$0xff]
        %v525 = vld [vmem:[%s382 + $0x230] sm:$0xff]
        %v526 = vld [vmem:[%s382 + $0x238] sm:$0xff]
        %v527 = vld [vmem:[%s382 + $0x240] sm:$0xff]
        %v528 = vld [vmem:[%s382 + $0x248] sm:$0xff]
        %v529 = vld [vmem:[%s382 + $0x250] sm:$0xff]
        %v530 = vld [vmem:[%s382 + $0x258] sm:$0xff]
        %v531 = vld [vmem:[%s382 + $0x260] sm:$0xff]
        %v532 = vld [vmem:[%s382 + $0x268] sm:$0xff]
        %v533 = vld [vmem:[%s382 + $0x270] sm:$0xff]
        %v534 = vld [vmem:[%s382 + $0x278] sm:$0xff]
        %v535 = vld [vmem:[%s382 + $0x280] sm:$0xff]
        %v536 = vld [vmem:[%s382 + $0x288] sm:$0xff]
        %v537 = vld [vmem:[%s382 + $0x290] sm:$0xff]
        %v538 = vld [vmem:[%s382 + $0x298] sm:$0xff]
        %v539 = vld [vmem:[%s382 + $0x2a0] sm:$0xff]
        %v540 = vld [vmem:[%s382 + $0x2a8] sm:$0xff]
        %v541 = vld [vmem:[%s382 + $0x2b0] sm:$0xff]
        %v542 = vld [vmem:[%s382 + $0x2b8] sm:$0xff]
        %v543 = vld [vmem:[%s382 + $0x2c0] sm:$0xff]
        %v544 = vld [vmem:[%s382 + $0x2c8] sm:$0xff]
        %v545 = vld [vmem:[%s382 + $0x2d0] sm:$0xff]
        %v546 = vld [vmem:[%s382 + $0x2d8] sm:$0xff]
        %v547 = vld [vmem:[%s382 + $0x2e0] sm:$0xff]
        %v548 = vld [vmem:[%s382 + $0x2e8] sm:$0xff]
        %v549 = vld [vmem:[%s382 + $0x2f0] sm:$0xff]
        %v550 = vld [vmem:[%s382 + $0x2f8] sm:$0xff]
        %v551 = vld [vmem:[%s382 + $0x300] sm:$0xff]
        %v552 = vld [vmem:[%s382 + $0x308] sm:$0xff]
        %v553 = vld [vmem:[%s382 + $0x310] sm:$0xff]
        %v554 = vld [vmem:[%s382 + $0x318] sm:$0xff]
        %v555 = vld [vmem:[%s382 + $0x320] sm:$0xff]
        %v556 = vld [vmem:[%s382 + $0x328] sm:$0xff]
        %v557 = vld [vmem:[%s382 + $0x330] sm:$0xff]
        %v558 = vld [vmem:[%s382 + $0x338] sm:$0xff]
        %v559 = vld [vmem:[%s382 + $0x340] sm:$0xff]
        %v560 = vld [vmem:[%s382 + $0x348] sm:$0xff]
        %v561 = vld [vmem:[%s382 + $0x350] sm:$0xff]
        %v562 = vld [vmem:[%s382 + $0x358] sm:$0xff]
        %v563 = vld [vmem:[%s382 + $0x360] sm:$0xff]
        %v564 = vld [vmem:[%s382 + $0x368] sm:$0xff]
        %v565 = vld [vmem:[%s382 + $0x370] sm:$0xff]
        %v566 = vld [vmem:[%s382 + $0x378] sm:$0xff]
        %v567 = vpack.c.bf16 %v462, %v455
        %v568 = vpack.c.bf16 %v463, %v456
        %v569 = vpack.c.bf16 %v464, %v457
        %v570 = vpack.c.bf16 %v465, %v458
        %v571 = vpack.c.bf16 %v466, %v459
        %v572 = vpack.c.bf16 %v467, %v460
        %v573 = vpack.c.bf16 %v468, %v461
        %v574 = vpack.c.bf16 %v476, %v469
        %v575 = vpack.c.bf16 %v477, %v470
        %v576 = vpack.c.bf16 %v478, %v471
        %v577 = vpack.c.bf16 %v479, %v472
        %v578 = vpack.c.bf16 %v480, %v473
        %v579 = vpack.c.bf16 %v481, %v474
        %v580 = vpack.c.bf16 %v482, %v475
        %v581 = vpack.c.bf16 %v490, %v483
        %v582 = vpack.c.bf16 %v491, %v484
        %v583 = vpack.c.bf16 %v492, %v485
        %v584 = vpack.c.bf16 %v493, %v486
        %v585 = vpack.c.bf16 %v494, %v487
        %v586 = vpack.c.bf16 %v495, %v488
        %v587 = vpack.c.bf16 %v496, %v489
        %v588 = vpack.c.bf16 %v504, %v497
        %v589 = vpack.c.bf16 %v505, %v498
        %v590 = vpack.c.bf16 %v506, %v499
        %v591 = vpack.c.bf16 %v507, %v500
        %v592 = vpack.c.bf16 %v508, %v501
        %v593 = vpack.c.bf16 %v509, %v502
        %v594 = vpack.c.bf16 %v510, %v503
        %v595 = vpack.c.bf16 %v518, %v511
        %v596 = vpack.c.bf16 %v519, %v512
        %v597 = vpack.c.bf16 %v520, %v513
        %v598 = vpack.c.bf16 %v521, %v514
        %v599 = vpack.c.bf16 %v522, %v515
        %v600 = vpack.c.bf16 %v523, %v516
        %v601 = vpack.c.bf16 %v524, %v517
        %v602 = vpack.c.bf16 %v532, %v525
        %v603 = vpack.c.bf16 %v533, %v526
        %v604 = vpack.c.bf16 %v534, %v527
        %v605 = vpack.c.bf16 %v535, %v528
        %v606 = vpack.c.bf16 %v536, %v529
        %v607 = vpack.c.bf16 %v537, %v530
        %v608 = vpack.c.bf16 %v538, %v531
        %v609 = vpack.c.bf16 %v546, %v539
        %v610 = vpack.c.bf16 %v547, %v540
        %v611 = vpack.c.bf16 %v548, %v541
        %v612 = vpack.c.bf16 %v549, %v542
        %v613 = vpack.c.bf16 %v550, %v543
        %v614 = vpack.c.bf16 %v551, %v544
        %v615 = vpack.c.bf16 %v552, %v545
        %v616 = vpack.c.bf16 %v560, %v553
        %v617 = vpack.c.bf16 %v561, %v554
        %v618 = vpack.c.bf16 %v562, %v555
        %v619 = vpack.c.bf16 %v563, %v556
        %v620 = vpack.c.bf16 %v564, %v557
        %v621 = vpack.c.bf16 %v565, %v558
        %v622 = vpack.c.bf16 %v566, %v559
        %v623 = vld [vmem:[#allocation5] sm:$0xff]
        %v624 = vld [vmem:[#allocation5 + $0x8] sm:$0xff]
        %v625 = vld [vmem:[#allocation5 + $0x10] sm:$0xff]
        %v626 = vld [vmem:[#allocation5 + $0x18] sm:$0xff]
        %v627 = vld [vmem:[#allocation5 + $0x20] sm:$0xff]
        %v628 = vld [vmem:[#allocation5 + $0x28] sm:$0xff]
        %v629 = vld [vmem:[#allocation5 + $0x30] sm:$0xff]
        %v630 = vld [vmem:[#allocation5 + $0x38] sm:$0xff]
        %v631 = vld [vmem:[#allocation5 + $0x40] sm:$0xff]
        %v632 = vld [vmem:[#allocation5 + $0x48] sm:$0xff]
        %v633 = vld [vmem:[#allocation5 + $0x50] sm:$0xff]
        %v634 = vld [vmem:[#allocation5 + $0x58] sm:$0xff]
        %v635 = vld [vmem:[#allocation5 + $0x60] sm:$0xff]
        %v636 = vld [vmem:[#allocation5 + $0x68] sm:$0xff]
        %v637 = vld [vmem:[#allocation5 + $0x70] sm:$0xff]
        %v638 = vld [vmem:[#allocation5 + $0x78] sm:$0xff]
        %v639 = vld [vmem:[#allocation5 + $0x80] sm:$0xff]
        %v640 = vld [vmem:[#allocation5 + $0x88] sm:$0xff]
        %v641 = vld [vmem:[#allocation5 + $0x90] sm:$0xff]
        %v642 = vld [vmem:[#allocation5 + $0x98] sm:$0xff]
        %v643 = vld [vmem:[#allocation5 + $0xa0] sm:$0xff]
        %v644 = vld [vmem:[#allocation5 + $0xa8] sm:$0xff]
        %v645 = vld [vmem:[#allocation5 + $0xb0] sm:$0xff]
        %v646 = vld [vmem:[#allocation5 + $0xb8] sm:$0xff]
        %v647 = vld [vmem:[#allocation5 + $0xc0] sm:$0xff]
        %v648 = vld [vmem:[#allocation5 + $0xc8] sm:$0xff]
        %v649 = vld [vmem:[#allocation5 + $0xd0] sm:$0xff]
        %v650 = vld [vmem:[#allocation5 + $0xd8] sm:$0xff]
        %v651 = vld [vmem:[#allocation5 + $0xe0] sm:$0xff]
        %v652 = vld [vmem:[#allocation5 + $0xe8] sm:$0xff]
        %v653 = vld [vmem:[#allocation5 + $0xf0] sm:$0xff]
        %v654 = vld [vmem:[#allocation5 + $0xf8] sm:$0xff]
        %v655 = vld [vmem:[#allocation5 + $0x100] sm:$0xff]
        %v656 = vld [vmem:[#allocation5 + $0x108] sm:$0xff]
        %v657 = vld [vmem:[#allocation5 + $0x110] sm:$0xff]
        %v658 = vld [vmem:[#allocation5 + $0x118] sm:$0xff]
        %v659 = vld [vmem:[#allocation5 + $0x120] sm:$0xff]
        %v660 = vld [vmem:[#allocation5 + $0x128] sm:$0xff]
        %v661 = vld [vmem:[#allocation5 + $0x130] sm:$0xff]
        %v662 = vld [vmem:[#allocation5 + $0x138] sm:$0xff]
        %v663 = vld [vmem:[#allocation5 + $0x140] sm:$0xff]
        %v664 = vld [vmem:[#allocation5 + $0x148] sm:$0xff]
        %v665 = vld [vmem:[#allocation5 + $0x150] sm:$0xff]
        %v666 = vld [vmem:[#allocation5 + $0x158] sm:$0xff]
        %v667 = vld [vmem:[#allocation5 + $0x160] sm:$0xff]
        %v668 = vld [vmem:[#allocation5 + $0x168] sm:$0xff]
        %v669 = vld [vmem:[#allocation5 + $0x170] sm:$0xff]
        %v670 = vld [vmem:[#allocation5 + $0x178] sm:$0xff]
        %v671 = vld [vmem:[#allocation5 + $0x180] sm:$0xff]
        %v672 = vld [vmem:[#allocation5 + $0x188] sm:$0xff]
        %v673 = vld [vmem:[#allocation5 + $0x190] sm:$0xff]
        %v674 = vld [vmem:[#allocation5 + $0x198] sm:$0xff]
        %v675 = vld [vmem:[#allocation5 + $0x1a0] sm:$0xff]
        %v676 = vld [vmem:[#allocation5 + $0x1a8] sm:$0xff]
        %v677 = vld [vmem:[#allocation5 + $0x1b0] sm:$0xff]
        %v678 = vld [vmem:[#allocation5 + $0x1b8] sm:$0xff]
        %v679 = vld [vmem:[#allocation5 + $0x1c0] sm:$0xff]
        %v680 = vld [vmem:[#allocation5 + $0x1c8] sm:$0xff]
        %v681 = vld [vmem:[#allocation5 + $0x1d0] sm:$0xff]
        %v682 = vld [vmem:[#allocation5 + $0x1d8] sm:$0xff]
        %v683 = vld [vmem:[#allocation5 + $0x1e0] sm:$0xff]
        %v684 = vld [vmem:[#allocation5 + $0x1e8] sm:$0xff]
        %v685 = vld [vmem:[#allocation5 + $0x1f0] sm:$0xff]
        %v686 = vld [vmem:[#allocation5 + $0x1f8] sm:$0xff]
        %v687 = vld [vmem:[#allocation5 + $0x200] sm:$0xff]
        %v688 = vld [vmem:[#allocation5 + $0x208] sm:$0xff]
        %v689 = vld [vmem:[#allocation5 + $0x210] sm:$0xff]
        %v690 = vld [vmem:[#allocation5 + $0x218] sm:$0xff]
        %v691 = vld [vmem:[#allocation5 + $0x220] sm:$0xff]
        %v692 = vld [vmem:[#allocation5 + $0x228] sm:$0xff]
        %v693 = vld [vmem:[#allocation5 + $0x230] sm:$0xff]
        %v694 = vld [vmem:[#allocation5 + $0x238] sm:$0xff]
        %v695 = vld [vmem:[#allocation5 + $0x240] sm:$0xff]
        %v696 = vld [vmem:[#allocation5 + $0x248] sm:$0xff]
        %v697 = vld [vmem:[#allocation5 + $0x250] sm:$0xff]
        %v698 = vld [vmem:[#allocation5 + $0x258] sm:$0xff]
        %v699 = vld [vmem:[#allocation5 + $0x260] sm:$0xff]
        %v700 = vld [vmem:[#allocation5 + $0x268] sm:$0xff]
        %v701 = vld [vmem:[#allocation5 + $0x270] sm:$0xff]
        %v702 = vld [vmem:[#allocation5 + $0x278] sm:$0xff]
        %v703 = vld [vmem:[#allocation5 + $0x280] sm:$0xff]
        %v704 = vld [vmem:[#allocation5 + $0x288] sm:$0xff]
        %v705 = vld [vmem:[#allocation5 + $0x290] sm:$0xff]
        %v706 = vld [vmem:[#allocation5 + $0x298] sm:$0xff]
        %v707 = vld [vmem:[#allocation5 + $0x2a0] sm:$0xff]
        %v708 = vld [vmem:[#allocation5 + $0x2a8] sm:$0xff]
        %v709 = vld [vmem:[#allocation5 + $0x2b0] sm:$0xff]
        %v710 = vld [vmem:[#allocation5 + $0x2b8] sm:$0xff]
        %v711 = vld [vmem:[#allocation5 + $0x2c0] sm:$0xff]
        %v712 = vld [vmem:[#allocation5 + $0x2c8] sm:$0xff]
        %v713 = vld [vmem:[#allocation5 + $0x2d0] sm:$0xff]
        %v714 = vld [vmem:[#allocation5 + $0x2d8] sm:$0xff]
        %v715 = vld [vmem:[#allocation5 + $0x2e0] sm:$0xff]
        %v716 = vld [vmem:[#allocation5 + $0x2e8] sm:$0xff]
        %v717 = vld [vmem:[#allocation5 + $0x2f0] sm:$0xff]
        %v718 = vld [vmem:[#allocation5 + $0x2f8] sm:$0xff]
        %v719 = vld [vmem:[#allocation5 + $0x300] sm:$0xff]
        %v720 = vld [vmem:[#allocation5 + $0x308] sm:$0xff]
        %v721 = vld [vmem:[#allocation7] sm:$0x3]
        %v723 = vperm.slane %v721, 0
        %v724 = vperm.slane %v721, 1
        %v825 = vunpack.c.l.b16 %v623
        %v826 = vunpack.c.h.b16 %v623
        %v827 = vunpack.c.l.b16 %v624
        %v828 = vunpack.c.h.b16 %v624
        %v829 = vunpack.c.l.b16 %v625
        %v830 = vunpack.c.h.b16 %v625
        %v831 = vunpack.c.l.b16 %v626
        %v832 = vunpack.c.h.b16 %v626
        %v833 = vunpack.c.l.b16 %v627
        %v834 = vunpack.c.h.b16 %v627
        %v835 = vunpack.c.l.b16 %v628
        %v836 = vunpack.c.h.b16 %v628
        %v837 = vunpack.c.l.b16 %v629
        %v838 = vunpack.c.h.b16 %v629
        %v839 = vunpack.c.l.b16 %v630
        %v840 = vunpack.c.h.b16 %v630
        %v841 = vunpack.c.l.b16 %v631
        %v842 = vunpack.c.h.b16 %v631
        %v843 = vunpack.c.l.b16 %v632
        %v844 = vunpack.c.h.b16 %v632
        %v845 = vunpack.c.l.b16 %v633
        %v846 = vunpack.c.h.b16 %v633
        %v847 = vunpack.c.l.b16 %v634
        %v848 = vunpack.c.h.b16 %v634
        %v849 = vunpack.c.l.b16 %v635
        %v850 = vunpack.c.h.b16 %v635
        %v851 = vunpack.c.l.b16 %v636
        %v852 = vunpack.c.h.b16 %v636
        %v853 = vunpack.c.l.b16 %v637
        %v854 = vunpack.c.h.b16 %v637
        %v855 = vunpack.c.l.b16 %v638
        %v856 = vunpack.c.h.b16 %v638
        %v857 = vunpack.c.l.b16 %v639
        %v858 = vunpack.c.h.b16 %v639
        %v859 = vunpack.c.l.b16 %v640
        %v860 = vunpack.c.h.b16 %v640
        %v861 = vunpack.c.l.b16 %v641
        %v862 = vunpack.c.h.b16 %v641
        %v863 = vunpack.c.l.b16 %v642
        %v864 = vunpack.c.h.b16 %v642
        %v865 = vunpack.c.l.b16 %v643
        %v866 = vunpack.c.h.b16 %v643
        %v867 = vunpack.c.l.b16 %v644
        %v868 = vunpack.c.h.b16 %v644
        %v869 = vunpack.c.l.b16 %v645
        %v870 = vunpack.c.h.b16 %v645
        %v871 = vunpack.c.l.b16 %v646
        %v872 = vunpack.c.h.b16 %v646
        %v873 = vunpack.c.l.b16 %v647
        %v874 = vunpack.c.h.b16 %v647
        %v875 = vunpack.c.l.b16 %v648
        %v876 = vunpack.c.h.b16 %v648
        %v877 = vunpack.c.l.b16 %v649
        %v878 = vunpack.c.h.b16 %v649
        %v879 = vunpack.c.l.b16 %v650
        %v880 = vunpack.c.h.b16 %v650
        %v881 = vunpack.c.l.b16 %v651
        %v882 = vunpack.c.h.b16 %v651
        %v883 = vunpack.c.l.b16 %v652
        %v884 = vunpack.c.h.b16 %v652
        %v885 = vunpack.c.l.b16 %v653
        %v886 = vunpack.c.h.b16 %v653
        %v887 = vunpack.c.l.b16 %v654
        %v888 = vunpack.c.h.b16 %v654
        %v889 = vunpack.c.l.b16 %v655
        %v890 = vunpack.c.h.b16 %v655
        %v891 = vunpack.c.l.b16 %v656
        %v892 = vunpack.c.h.b16 %v656
        %v893 = vunpack.c.l.b16 %v657
        %v894 = vunpack.c.h.b16 %v657
        %v895 = vunpack.c.l.b16 %v658
        %v896 = vunpack.c.h.b16 %v658
        %v897 = vunpack.c.l.b16 %v659
        %v898 = vunpack.c.h.b16 %v659
        %v899 = vunpack.c.l.b16 %v660
        %v900 = vunpack.c.h.b16 %v660
        %v901 = vunpack.c.l.b16 %v661
        %v902 = vunpack.c.h.b16 %v661
        %v903 = vunpack.c.l.b16 %v662
        %v904 = vunpack.c.h.b16 %v662
        %v905 = vunpack.c.l.b16 %v663
        %v906 = vunpack.c.h.b16 %v663
        %v907 = vunpack.c.l.b16 %v664
        %v908 = vunpack.c.h.b16 %v664
        %v909 = vunpack.c.l.b16 %v665
        %v910 = vunpack.c.h.b16 %v665
        %v911 = vunpack.c.l.b16 %v666
        %v912 = vunpack.c.h.b16 %v666
        %v913 = vunpack.c.l.b16 %v667
        %v914 = vunpack.c.h.b16 %v667
        %v915 = vunpack.c.l.b16 %v668
        %v916 = vunpack.c.h.b16 %v668
        %v917 = vunpack.c.l.b16 %v669
        %v918 = vunpack.c.h.b16 %v669
        %v919 = vunpack.c.l.b16 %v670
        %v920 = vunpack.c.h.b16 %v670
        %v921 = vunpack.c.l.b16 %v671
        %v922 = vunpack.c.h.b16 %v671
        %v923 = vunpack.c.l.b16 %v672
        %v924 = vunpack.c.h.b16 %v672
        %v925 = vunpack.c.l.b16 %v673
        %v926 = vunpack.c.h.b16 %v673
        %v927 = vunpack.c.l.b16 %v674
        %v928 = vunpack.c.h.b16 %v674
        %v929 = vunpack.c.l.b16 %v675
        %v930 = vunpack.c.h.b16 %v675
        %v931 = vunpack.c.l.b16 %v676
        %v932 = vunpack.c.h.b16 %v676
        %v933 = vunpack.c.l.b16 %v677
        %v934 = vunpack.c.h.b16 %v677
        %v935 = vunpack.c.l.b16 %v678
        %v936 = vunpack.c.h.b16 %v678
        %v937 = vunpack.c.l.b16 %v679
        %v938 = vunpack.c.h.b16 %v679
        %v939 = vunpack.c.l.b16 %v680
        %v940 = vunpack.c.h.b16 %v680
        %v941 = vunpack.c.l.b16 %v681
        %v942 = vunpack.c.h.b16 %v681
        %v943 = vunpack.c.l.b16 %v682
        %v944 = vunpack.c.h.b16 %v682
        %v945 = vunpack.c.l.b16 %v683
        %v946 = vunpack.c.h.b16 %v683
        %v947 = vunpack.c.l.b16 %v684
        %v948 = vunpack.c.h.b16 %v684
        %v949 = vunpack.c.l.b16 %v685
        %v950 = vunpack.c.h.b16 %v685
        %v951 = vunpack.c.l.b16 %v686
        %v952 = vunpack.c.h.b16 %v686
        %v953 = vunpack.c.l.b16 %v687
        %v954 = vunpack.c.h.b16 %v687
        %v955 = vunpack.c.l.b16 %v688
        %v956 = vunpack.c.h.b16 %v688
        %v957 = vunpack.c.l.b16 %v689
        %v958 = vunpack.c.h.b16 %v689
        %v959 = vunpack.c.l.b16 %v690
        %v960 = vunpack.c.h.b16 %v690
        %v961 = vunpack.c.l.b16 %v691
        %v962 = vunpack.c.h.b16 %v691
        %v963 = vunpack.c.l.b16 %v692
        %v964 = vunpack.c.h.b16 %v692
        %v965 = vunpack.c.l.b16 %v693
        %v966 = vunpack.c.h.b16 %v693
        %v967 = vunpack.c.l.b16 %v694
        %v968 = vunpack.c.h.b16 %v694
        %v969 = vunpack.c.l.b16 %v695
        %v970 = vunpack.c.h.b16 %v695
        %v971 = vunpack.c.l.b16 %v696
        %v972 = vunpack.c.h.b16 %v696
        %v973 = vunpack.c.l.b16 %v697
        %v974 = vunpack.c.h.b16 %v697
        %v975 = vunpack.c.l.b16 %v698
        %v976 = vunpack.c.h.b16 %v698
        %v977 = vunpack.c.l.b16 %v699
        %v978 = vunpack.c.h.b16 %v699
        %v979 = vunpack.c.l.b16 %v700
        %v980 = vunpack.c.h.b16 %v700
        %v981 = vunpack.c.l.b16 %v701
        %v982 = vunpack.c.h.b16 %v701
        %v983 = vunpack.c.l.b16 %v702
        %v984 = vunpack.c.h.b16 %v702
        %v985 = vunpack.c.l.b16 %v703
        %v986 = vunpack.c.h.b16 %v703
        %v987 = vunpack.c.l.b16 %v704
        %v988 = vunpack.c.h.b16 %v704
        %v989 = vunpack.c.l.b16 %v705
        %v990 = vunpack.c.h.b16 %v705
        %v991 = vunpack.c.l.b16 %v706
        %v992 = vunpack.c.h.b16 %v706
        %v993 = vunpack.c.l.b16 %v707
        %v994 = vunpack.c.h.b16 %v707
        %v995 = vunpack.c.l.b16 %v708
        %v996 = vunpack.c.h.b16 %v708
        %v997 = vunpack.c.l.b16 %v709
        %v998 = vunpack.c.h.b16 %v709
        %v999 = vunpack.c.l.b16 %v710
        %v1000 = vunpack.c.h.b16 %v710
        %v1001 = vunpack.c.l.b16 %v711
        %v1002 = vunpack.c.h.b16 %v711
        %v1003 = vunpack.c.l.b16 %v712
        %v1004 = vunpack.c.h.b16 %v712
        %v1005 = vunpack.c.l.b16 %v713
        %v1006 = vunpack.c.h.b16 %v713
        %v1007 = vunpack.c.l.b16 %v714
        %v1008 = vunpack.c.h.b16 %v714
        %v1009 = vunpack.c.l.b16 %v715
        %v1010 = vunpack.c.h.b16 %v715
        %v1011 = vunpack.c.l.b16 %v716
        %v1012 = vunpack.c.h.b16 %v716
        %v1013 = vunpack.c.l.b16 %v717
        %v1014 = vunpack.c.h.b16 %v717
        %v1015 = vunpack.c.l.b16 %v718
        %v1016 = vunpack.c.h.b16 %v718
        %v1017 = vunpack.c.l.b16 %v719
        %v1018 = vunpack.c.h.b16 %v719
        %v1019 = vunpack.c.l.b16 %v720
        %v1020 = vunpack.c.h.b16 %v720
        %v1021 = vpack.c.b16 %v827, %v825
        %v1022 = vpack.c.b16 %v828, %v826
        %v1023 = vpack.c.b16 %v831, %v829
        %v1024 = vpack.c.b16 %v832, %v830
        %v1025 = vpack.c.b16 %v835, %v833
        %v1026 = vpack.c.b16 %v836, %v834
        %v1027 = vpack.c.b16 %v839, %v837
        %v1028 = vpack.c.b16 %v840, %v838
        %v1029 = vpack.c.b16 %v843, %v841
        %v1030 = vpack.c.b16 %v844, %v842
        %v1031 = vpack.c.b16 %v847, %v845
        %v1032 = vpack.c.b16 %v848, %v846
        %v1033 = vpack.c.b16 %v851, %v849
        %v1034 = vpack.c.b16 %v852, %v850
        %v1035 = vpack.c.b16 %v855, %v853
        %v1036 = vpack.c.b16 %v856, %v854
        %v1037 = vpack.c.b16 %v859, %v857
        %v1038 = vpack.c.b16 %v860, %v858
        %v1039 = vpack.c.b16 %v863, %v861
        %v1040 = vpack.c.b16 %v864, %v862
        %v1041 = vpack.c.b16 %v867, %v865
        %v1042 = vpack.c.b16 %v868, %v866
        %v1043 = vpack.c.b16 %v871, %v869
        %v1044 = vpack.c.b16 %v872, %v870
        %v1045 = vpack.c.b16 %v875, %v873
        %v1046 = vpack.c.b16 %v876, %v874
        %v1047 = vpack.c.b16 %v879, %v877
        %v1048 = vpack.c.b16 %v880, %v878
        %v1049 = vpack.c.b16 %v883, %v881
        %v1050 = vpack.c.b16 %v884, %v882
        %v1051 = vpack.c.b16 %v887, %v885
        %v1052 = vpack.c.b16 %v888, %v886
        %v1053 = vpack.c.b16 %v891, %v889
        %v1054 = vpack.c.b16 %v892, %v890
        %v1055 = vpack.c.b16 %v895, %v893
        %v1056 = vpack.c.b16 %v896, %v894
        %v1057 = vpack.c.b16 %v899, %v897
        %v1058 = vpack.c.b16 %v900, %v898
        %v1059 = vpack.c.b16 %v903, %v901
        %v1060 = vpack.c.b16 %v904, %v902
        %v1061 = vpack.c.b16 %v907, %v905
        %v1062 = vpack.c.b16 %v908, %v906
        %v1063 = vpack.c.b16 %v911, %v909
        %v1064 = vpack.c.b16 %v912, %v910
        %v1065 = vpack.c.b16 %v915, %v913
        %v1066 = vpack.c.b16 %v916, %v914
        %v1067 = vpack.c.b16 %v919, %v917
        %v1068 = vpack.c.b16 %v920, %v918
        %v1069 = vpack.c.b16 %v923, %v921
        %v1070 = vpack.c.b16 %v924, %v922
        %v1071 = vpack.c.b16 %v927, %v925
        %v1072 = vpack.c.b16 %v928, %v926
        %v1073 = vpack.c.b16 %v931, %v929
        %v1074 = vpack.c.b16 %v932, %v930
        %v1075 = vpack.c.b16 %v935, %v933
        %v1076 = vpack.c.b16 %v936, %v934
        %v1077 = vpack.c.b16 %v939, %v937
        %v1078 = vpack.c.b16 %v940, %v938
        %v1079 = vpack.c.b16 %v943, %v941
        %v1080 = vpack.c.b16 %v944, %v942
        %v1081 = vpack.c.b16 %v947, %v945
        %v1082 = vpack.c.b16 %v948, %v946
        %v1083 = vpack.c.b16 %v951, %v949
        %v1084 = vpack.c.b16 %v952, %v950
        %v1085 = vpack.c.b16 %v955, %v953
        %v1086 = vpack.c.b16 %v956, %v954
        %v1087 = vpack.c.b16 %v959, %v957
        %v1088 = vpack.c.b16 %v960, %v958
        %v1089 = vpack.c.b16 %v963, %v961
        %v1090 = vpack.c.b16 %v964, %v962
        %v1091 = vpack.c.b16 %v967, %v965
        %v1092 = vpack.c.b16 %v968, %v966
        %v1093 = vpack.c.b16 %v971, %v969
        %v1094 = vpack.c.b16 %v972, %v970
        %v1095 = vpack.c.b16 %v975, %v973
        %v1096 = vpack.c.b16 %v976, %v974
        %v1097 = vpack.c.b16 %v979, %v977
        %v1098 = vpack.c.b16 %v980, %v978
        %v1099 = vpack.c.b16 %v983, %v981
        %v1100 = vpack.c.b16 %v984, %v982
        %v1101 = vpack.c.b16 %v987, %v985
        %v1102 = vpack.c.b16 %v988, %v986
        %v1103 = vpack.c.b16 %v991, %v989
        %v1104 = vpack.c.b16 %v992, %v990
        %v1105 = vpack.c.b16 %v995, %v993
        %v1106 = vpack.c.b16 %v996, %v994
        %v1107 = vpack.c.b16 %v999, %v997
        %v1108 = vpack.c.b16 %v1000, %v998
        %v1109 = vpack.c.b16 %v1003, %v1001
        %v1110 = vpack.c.b16 %v1004, %v1002
        %v1111 = vpack.c.b16 %v1007, %v1005
        %v1112 = vpack.c.b16 %v1008, %v1006
        %v1113 = vpack.c.b16 %v1011, %v1009
        %v1114 = vpack.c.b16 %v1012, %v1010
        %v1115 = vpack.c.b16 %v1015, %v1013
        %v1116 = vpack.c.b16 %v1016, %v1014
        %v1117 = vpack.c.b16 %v1019, %v1017
        %v1118 = vpack.c.b16 %v1020, %v1018
        %vm1217 = vcmask 130048
        %v1219 = vsel %vm1217, %v573, 0
        %v1222 = vsel %vm1217, %v580, 0
        %v1225 = vsel %vm1217, %v587, 0
        %v1228 = vsel %vm1217, %v594, 0
        %v1231 = vsel %vm1217, %v601, 0
        %v1234 = vsel %vm1217, %v608, 0
        %v1237 = vsel %vm1217, %v615, 0
        %v1240 = vsel %vm1217, %v622, 0
        %1242 = vmatpush.bf16.msra.mxu0 %v1035
        %1243 = vmatpush.bf16.msra.mxu0 %v1033
        %1244 = vmatpush.bf16.msra.mxu0 %v1031
        %1245 = vmatpush.bf16.msra.mxu0 %v1029
        %1246 = vmatpush.bf16.msra.mxu0 %v1027
        %1247 = vmatpush.bf16.msra.mxu0 %v1025
        %1248 = vmatpush.bf16.msra.mxu0 %v1023
        %1249 = vmatpush.bf16.msra.mxu0 %v1021
        %1250 = vmatmul.bf16.gmra.mxu0 %v567
        %v1251 = vpop.f32.mrf.mxu0
        %v1252 = vadd.f32 %v723, %v1251
        %v1253 = vpop.f32.mrf.mxu0
        %v1254 = vadd.f32 %v723, %v1253
        %1255 = vmatmul.bf16.gmra.mxu0 %v574
        %v1256 = vpop.f32.mrf.mxu0
        %v1257 = vadd.f32 %v723, %v1256
        %v1258 = vpop.f32.mrf.mxu0
        %v1259 = vadd.f32 %v723, %v1258
        %1260 = vmatmul.bf16.gmra.mxu0 %v581
        %v1261 = vpop.f32.mrf.mxu0
        %v1262 = vadd.f32 %v723, %v1261
        %v1263 = vpop.f32.mrf.mxu0
        %v1264 = vadd.f32 %v723, %v1263
        %1265 = vmatmul.bf16.gmra.mxu0 %v588
        %v1266 = vpop.f32.mrf.mxu0
        %v1267 = vadd.f32 %v723, %v1266
        %v1268 = vpop.f32.mrf.mxu0
        %v1269 = vadd.f32 %v723, %v1268
        %1270 = vmatmul.bf16.gmra.mxu0 %v595
        %v1271 = vpop.f32.mrf.mxu0
        %v1272 = vadd.f32 %v723, %v1271
        %v1273 = vpop.f32.mrf.mxu0
        %v1274 = vadd.f32 %v723, %v1273
        %1275 = vmatmul.bf16.gmra.mxu0 %v602
        %v1276 = vpop.f32.mrf.mxu0
        %v1277 = vadd.f32 %v723, %v1276
        %v1278 = vpop.f32.mrf.mxu0
        %v1279 = vadd.f32 %v723, %v1278
        %1280 = vmatmul.bf16.gmra.mxu0 %v609
        %v1281 = vpop.f32.mrf.mxu0
        %v1282 = vadd.f32 %v723, %v1281
        %v1283 = vpop.f32.mrf.mxu0
        %v1284 = vadd.f32 %v723, %v1283
        %1285 = vmatmul.bf16.gmra.mxu0 %v616
        %v1286 = vpop.f32.mrf.mxu0
        %v1287 = vadd.f32 %v723, %v1286
        %v1288 = vpop.f32.mrf.mxu0
        %v1289 = vadd.f32 %v723, %v1288
        %1290 = vdwg.mxu0
        %1291 = vmatpush.bf16.msra.mxu0 %v1051
        %1292 = vmatpush.bf16.msra.mxu0 %v1049
        %1293 = vmatpush.bf16.msra.mxu0 %v1047
        %1294 = vmatpush.bf16.msra.mxu0 %v1045
        %1295 = vmatpush.bf16.msra.mxu0 %v1043
        %1296 = vmatpush.bf16.msra.mxu0 %v1041
        %1297 = vmatpush.bf16.msra.mxu0 %v1039
        %1298 = vmatpush.bf16.msra.mxu0 %v1037
        %1299 = vmatmul.bf16.gmra.mxu0 %v568
        %v1300 = vpop.f32.mrf.mxu0
        %v1301 = vadd.f32 %v1252, %v1300
        %v1302 = vpop.f32.mrf.mxu0
        %v1303 = vadd.f32 %v1254, %v1302
        %1304 = vmatmul.bf16.gmra.mxu0 %v575
        %v1305 = vpop.f32.mrf.mxu0
        %v1306 = vadd.f32 %v1257, %v1305
        %v1307 = vpop.f32.mrf.mxu0
        %v1308 = vadd.f32 %v1259, %v1307
        %1309 = vmatmul.bf16.gmra.mxu0 %v582
        %v1310 = vpop.f32.mrf.mxu0
        %v1311 = vadd.f32 %v1262, %v1310
        %v1312 = vpop.f32.mrf.mxu0
        %v1313 = vadd.f32 %v1264, %v1312
        %1314 = vmatmul.bf16.gmra.mxu0 %v589
        %v1315 = vpop.f32.mrf.mxu0
        %v1316 = vadd.f32 %v1267, %v1315
        %v1317 = vpop.f32.mrf.mxu0
        %v1318 = vadd.f32 %v1269, %v1317
        %1319 = vmatmul.bf16.gmra.mxu0 %v596
        %v1320 = vpop.f32.mrf.mxu0
        %v1321 = vadd.f32 %v1272, %v1320
        %v1322 = vpop.f32.mrf.mxu0
        %v1323 = vadd.f32 %v1274, %v1322
        %1324 = vmatmul.bf16.gmra.mxu0 %v603
        %v1325 = vpop.f32.mrf.mxu0
        %v1326 = vadd.f32 %v1277, %v1325
        %v1327 = vpop.f32.mrf.mxu0
        %v1328 = vadd.f32 %v1279, %v1327
        %1329 = vmatmul.bf16.gmra.mxu0 %v610
        %v1330 = vpop.f32.mrf.mxu0
        %v1331 = vadd.f32 %v1282, %v1330
        %v1332 = vpop.f32.mrf.mxu0
        %v1333 = vadd.f32 %v1284, %v1332
        %1334 = vmatmul.bf16.gmra.mxu0 %v617
        %v1335 = vpop.f32.mrf.mxu0
        %v1336 = vadd.f32 %v1287, %v1335
        %v1337 = vpop.f32.mrf.mxu0
        %v1338 = vadd.f32 %v1289, %v1337
        %1339 = vdwg.mxu0
        %1340 = vmatpush.bf16.msra.mxu0 %v1067
        %1341 = vmatpush.bf16.msra.mxu0 %v1065
        %1342 = vmatpush.bf16.msra.mxu0 %v1063
        %1343 = vmatpush.bf16.msra.mxu0 %v1061
        %1344 = vmatpush.bf16.msra.mxu0 %v1059
        %1345 = vmatpush.bf16.msra.mxu0 %v1057
        %1346 = vmatpush.bf16.msra.mxu0 %v1055
        %1347 = vmatpush.bf16.msra.mxu0 %v1053
        %1348 = vmatmul.bf16.gmra.mxu0 %v569
        %v1349 = vpop.f32.mrf.mxu0
        %v1350 = vadd.f32 %v1301, %v1349
        %v1351 = vpop.f32.mrf.mxu0
        %v1352 = vadd.f32 %v1303, %v1351
        %1353 = vmatmul.bf16.gmra.mxu0 %v576
        %v1354 = vpop.f32.mrf.mxu0
        %v1355 = vadd.f32 %v1306, %v1354
        %v1356 = vpop.f32.mrf.mxu0
        %v1357 = vadd.f32 %v1308, %v1356
        %1358 = vmatmul.bf16.gmra.mxu0 %v583
        %v1359 = vpop.f32.mrf.mxu0
        %v1360 = vadd.f32 %v1311, %v1359
        %v1361 = vpop.f32.mrf.mxu0
        %v1362 = vadd.f32 %v1313, %v1361
        %1363 = vmatmul.bf16.gmra.mxu0 %v590
        %v1364 = vpop.f32.mrf.mxu0
        %v1365 = vadd.f32 %v1316, %v1364
        %v1366 = vpop.f32.mrf.mxu0
        %v1367 = vadd.f32 %v1318, %v1366
        %1368 = vmatmul.bf16.gmra.mxu0 %v597
        %v1369 = vpop.f32.mrf.mxu0
        %v1370 = vadd.f32 %v1321, %v1369
        %v1371 = vpop.f32.mrf.mxu0
        %v1372 = vadd.f32 %v1323, %v1371
        %1373 = vmatmul.bf16.gmra.mxu0 %v604
        %v1374 = vpop.f32.mrf.mxu0
        %v1375 = vadd.f32 %v1326, %v1374
        %v1376 = vpop.f32.mrf.mxu0
        %v1377 = vadd.f32 %v1328, %v1376
        %1378 = vmatmul.bf16.gmra.mxu0 %v611
        %v1379 = vpop.f32.mrf.mxu0
        %v1380 = vadd.f32 %v1331, %v1379
        %v1381 = vpop.f32.mrf.mxu0
        %v1382 = vadd.f32 %v1333, %v1381
        %1383 = vmatmul.bf16.gmra.mxu0 %v618
        %v1384 = vpop.f32.mrf.mxu0
        %v1385 = vadd.f32 %v1336, %v1384
        %v1386 = vpop.f32.mrf.mxu0
        %v1387 = vadd.f32 %v1338, %v1386
        %1388 = vdwg.mxu0
        %1389 = vmatpush.bf16.msra.mxu0 %v1083
        %1390 = vmatpush.bf16.msra.mxu0 %v1081
        %1391 = vmatpush.bf16.msra.mxu0 %v1079
        %1392 = vmatpush.bf16.msra.mxu0 %v1077
        %1393 = vmatpush.bf16.msra.mxu0 %v1075
        %1394 = vmatpush.bf16.msra.mxu0 %v1073
        %1395 = vmatpush.bf16.msra.mxu0 %v1071
        %1396 = vmatpush.bf16.msra.mxu0 %v1069
        %1397 = vmatmul.bf16.gmra.mxu0 %v570
        %v1398 = vpop.f32.mrf.mxu0
        %v1399 = vadd.f32 %v1350, %v1398
        %v1400 = vpop.f32.mrf.mxu0
        %v1401 = vadd.f32 %v1352, %v1400
        %1402 = vmatmul.bf16.gmra.mxu0 %v577
        %v1403 = vpop.f32.mrf.mxu0
        %v1404 = vadd.f32 %v1355, %v1403
        %v1405 = vpop.f32.mrf.mxu0
        %v1406 = vadd.f32 %v1357, %v1405
        %1407 = vmatmul.bf16.gmra.mxu0 %v584
        %v1408 = vpop.f32.mrf.mxu0
        %v1409 = vadd.f32 %v1360, %v1408
        %v1410 = vpop.f32.mrf.mxu0
        %v1411 = vadd.f32 %v1362, %v1410
        %1412 = vmatmul.bf16.gmra.mxu0 %v591
        %v1413 = vpop.f32.mrf.mxu0
        %v1414 = vadd.f32 %v1365, %v1413
        %v1415 = vpop.f32.mrf.mxu0
        %v1416 = vadd.f32 %v1367, %v1415
        %1417 = vmatmul.bf16.gmra.mxu0 %v598
        %v1418 = vpop.f32.mrf.mxu0
        %v1419 = vadd.f32 %v1370, %v1418
        %v1420 = vpop.f32.mrf.mxu0
        %v1421 = vadd.f32 %v1372, %v1420
        %1422 = vmatmul.bf16.gmra.mxu0 %v605
        %v1423 = vpop.f32.mrf.mxu0
        %v1424 = vadd.f32 %v1375, %v1423
        %v1425 = vpop.f32.mrf.mxu0
        %v1426 = vadd.f32 %v1377, %v1425
        %1427 = vmatmul.bf16.gmra.mxu0 %v612
        %v1428 = vpop.f32.mrf.mxu0
        %v1429 = vadd.f32 %v1380, %v1428
        %v1430 = vpop.f32.mrf.mxu0
        %v1431 = vadd.f32 %v1382, %v1430
        %1432 = vmatmul.bf16.gmra.mxu0 %v619
        %v1433 = vpop.f32.mrf.mxu0
        %v1434 = vadd.f32 %v1385, %v1433
        %v1435 = vpop.f32.mrf.mxu0
        %v1436 = vadd.f32 %v1387, %v1435
        %1437 = vdwg.mxu0
        %1438 = vmatpush.bf16.msra.mxu0 %v1099
        %1439 = vmatpush.bf16.msra.mxu0 %v1097
        %1440 = vmatpush.bf16.msra.mxu0 %v1095
        %1441 = vmatpush.bf16.msra.mxu0 %v1093
        %1442 = vmatpush.bf16.msra.mxu0 %v1091
        %1443 = vmatpush.bf16.msra.mxu0 %v1089
        %1444 = vmatpush.bf16.msra.mxu0 %v1087
        %1445 = vmatpush.bf16.msra.mxu0 %v1085
        %1446 = vmatmul.bf16.gmra.mxu0 %v571
        %v1447 = vpop.f32.mrf.mxu0
        %v1448 = vadd.f32 %v1399, %v1447
        %v1449 = vpop.f32.mrf.mxu0
        %v1450 = vadd.f32 %v1401, %v1449
        %1451 = vmatmul.bf16.gmra.mxu0 %v578
        %v1452 = vpop.f32.mrf.mxu0
        %v1453 = vadd.f32 %v1404, %v1452
        %v1454 = vpop.f32.mrf.mxu0
        %v1455 = vadd.f32 %v1406, %v1454
        %1456 = vmatmul.bf16.gmra.mxu0 %v585
        %v1457 = vpop.f32.mrf.mxu0
        %v1458 = vadd.f32 %v1409, %v1457
        %v1459 = vpop.f32.mrf.mxu0
        %v1460 = vadd.f32 %v1411, %v1459
        %1461 = vmatmul.bf16.gmra.mxu0 %v592
        %v1462 = vpop.f32.mrf.mxu0
        %v1463 = vadd.f32 %v1414, %v1462
        %v1464 = vpop.f32.mrf.mxu0
        %v1465 = vadd.f32 %v1416, %v1464
        %1466 = vmatmul.bf16.gmra.mxu0 %v599
        %v1467 = vpop.f32.mrf.mxu0
        %v1468 = vadd.f32 %v1419, %v1467
        %v1469 = vpop.f32.mrf.mxu0
        %v1470 = vadd.f32 %v1421, %v1469
        %1471 = vmatmul.bf16.gmra.mxu0 %v606
        %v1472 = vpop.f32.mrf.mxu0
        %v1473 = vadd.f32 %v1424, %v1472
        %v1474 = vpop.f32.mrf.mxu0
        %v1475 = vadd.f32 %v1426, %v1474
        %1476 = vmatmul.bf16.gmra.mxu0 %v613
        %v1477 = vpop.f32.mrf.mxu0
        %v1478 = vadd.f32 %v1429, %v1477
        %v1479 = vpop.f32.mrf.mxu0
        %v1480 = vadd.f32 %v1431, %v1479
        %1481 = vmatmul.bf16.gmra.mxu0 %v620
        %v1482 = vpop.f32.mrf.mxu0
        %v1483 = vadd.f32 %v1434, %v1482
        %v1484 = vpop.f32.mrf.mxu0
        %v1485 = vadd.f32 %v1436, %v1484
        %1486 = vdwg.mxu0
        %1487 = vmatpush.bf16.msra.mxu0 %v1115
        %1488 = vmatpush.bf16.msra.mxu0 %v1113
        %1489 = vmatpush.bf16.msra.mxu0 %v1111
        %1490 = vmatpush.bf16.msra.mxu0 %v1109
        %1491 = vmatpush.bf16.msra.mxu0 %v1107
        %1492 = vmatpush.bf16.msra.mxu0 %v1105
        %1493 = vmatpush.bf16.msra.mxu0 %v1103
        %1494 = vmatpush.bf16.msra.mxu0 %v1101
        %1495 = vmatmul.bf16.gmra.mxu0 %v572
        %v1496 = vpop.f32.mrf.mxu0
        %v1497 = vadd.f32 %v1448, %v1496
        %v1498 = vpop.f32.mrf.mxu0
        %v1499 = vadd.f32 %v1450, %v1498
        %1500 = vmatmul.bf16.gmra.mxu0 %v579
        %v1501 = vpop.f32.mrf.mxu0
        %v1502 = vadd.f32 %v1453, %v1501
        %v1503 = vpop.f32.mrf.mxu0
        %v1504 = vadd.f32 %v1455, %v1503
        %1505 = vmatmul.bf16.gmra.mxu0 %v586
        %v1506 = vpop.f32.mrf.mxu0
        %v1507 = vadd.f32 %v1458, %v1506
        %v1508 = vpop.f32.mrf.mxu0
        %v1509 = vadd.f32 %v1460, %v1508
        %1510 = vmatmul.bf16.gmra.mxu0 %v593
        %v1511 = vpop.f32.mrf.mxu0
        %v1512 = vadd.f32 %v1463, %v1511
        %v1513 = vpop.f32.mrf.mxu0
        %v1514 = vadd.f32 %v1465, %v1513
        %1515 = vmatmul.bf16.gmra.mxu0 %v600
        %v1516 = vpop.f32.mrf.mxu0
        %v1517 = vadd.f32 %v1468, %v1516
        %v1518 = vpop.f32.mrf.mxu0
        %v1519 = vadd.f32 %v1470, %v1518
        %1520 = vmatmul.bf16.gmra.mxu0 %v607
        %v1521 = vpop.f32.mrf.mxu0
        %v1522 = vadd.f32 %v1473, %v1521
        %v1523 = vpop.f32.mrf.mxu0
        %v1524 = vadd.f32 %v1475, %v1523
        %1525 = vmatmul.bf16.gmra.mxu0 %v614
        %v1526 = vpop.f32.mrf.mxu0
        %v1527 = vadd.f32 %v1478, %v1526
        %v1528 = vpop.f32.mrf.mxu0
        %v1529 = vadd.f32 %v1480, %v1528
        %1530 = vmatmul.bf16.gmra.mxu0 %v621
        %v1531 = vpop.f32.mrf.mxu0
        %v1532 = vadd.f32 %v1483, %v1531
        %v1533 = vpop.f32.mrf.mxu0
        %v1534 = vadd.f32 %v1485, %v1533
        %1535 = vdwg.mxu0
        %1536 = vmatpush.bf16.msra.mxu0 0
        %1537 = vmatpush.bf16.msra.mxu0 0
        %1538 = vmatpush.bf16.msra.mxu0 0
        %1539 = vmatpush.bf16.msra.mxu0 0
        %1540 = vmatpush.bf16.msra.mxu0 0
        %1541 = vmatpush.bf16.msra.mxu0 0
        %1542 = vmatpush.bf16.msra.mxu0 0
        %1543 = vmatpush.bf16.msra.mxu0 %v1117
        %1544 = vmatmul.bf16.gmra.mxu0 %v1219
        %v1545 = vpop.f32.mrf.mxu0
        %v1546 = vadd.f32 %v1497, %v1545
        %v1547 = vpop.f32.mrf.mxu0
        %v1548 = vadd.f32 %v1499, %v1547
        %1549 = vmatmul.bf16.gmra.mxu0 %v1222
        %v1550 = vpop.f32.mrf.mxu0
        %v1551 = vadd.f32 %v1502, %v1550
        %v1552 = vpop.f32.mrf.mxu0
        %v1553 = vadd.f32 %v1504, %v1552
        %1554 = vmatmul.bf16.gmra.mxu0 %v1225
        %v1555 = vpop.f32.mrf.mxu0
        %v1556 = vadd.f32 %v1507, %v1555
        %v1557 = vpop.f32.mrf.mxu0
        %v1558 = vadd.f32 %v1509, %v1557
        %1559 = vmatmul.bf16.gmra.mxu0 %v1228
        %v1560 = vpop.f32.mrf.mxu0
        %v1561 = vadd.f32 %v1512, %v1560
        %v1562 = vpop.f32.mrf.mxu0
        %v1563 = vadd.f32 %v1514, %v1562
        %1564 = vmatmul.bf16.gmra.mxu0 %v1231
        %v1565 = vpop.f32.mrf.mxu0
        %v1566 = vadd.f32 %v1517, %v1565
        %v1567 = vpop.f32.mrf.mxu0
        %v1568 = vadd.f32 %v1519, %v1567
        %1569 = vmatmul.bf16.gmra.mxu0 %v1234
        %v1570 = vpop.f32.mrf.mxu0
        %v1571 = vadd.f32 %v1522, %v1570
        %v1572 = vpop.f32.mrf.mxu0
        %v1573 = vadd.f32 %v1524, %v1572
        %1574 = vmatmul.bf16.gmra.mxu0 %v1237
        %v1575 = vpop.f32.mrf.mxu0
        %v1576 = vadd.f32 %v1527, %v1575
        %v1577 = vpop.f32.mrf.mxu0
        %v1578 = vadd.f32 %v1529, %v1577
        %1579 = vmatmul.bf16.gmra.mxu0 %v1240
        %v1580 = vpop.f32.mrf.mxu0
        %v1581 = vadd.f32 %v1532, %v1580
        %v1582 = vpop.f32.mrf.mxu0
        %v1583 = vadd.f32 %v1534, %v1582
        %1584 = vdwg.mxu0
        %1585 = vmatpush.bf16.msra.mxu0 %v1036
        %1586 = vmatpush.bf16.msra.mxu0 %v1034
        %1587 = vmatpush.bf16.msra.mxu0 %v1032
        %1588 = vmatpush.bf16.msra.mxu0 %v1030
        %1589 = vmatpush.bf16.msra.mxu0 %v1028
        %1590 = vmatpush.bf16.msra.mxu0 %v1026
        %1591 = vmatpush.bf16.msra.mxu0 %v1024
        %1592 = vmatpush.bf16.msra.mxu0 %v1022
        %1593 = vmatmul.bf16.gmra.mxu0 %v567
        %v1594 = vpop.f32.mrf.mxu0
        %v1595 = vadd.f32 %v724, %v1594
        %v1596 = vpop.f32.mrf.mxu0
        %v1597 = vadd.f32 %v724, %v1596
        %1598 = vmatmul.bf16.gmra.mxu0 %v574
        %v1599 = vpop.f32.mrf.mxu0
        %v1600 = vadd.f32 %v724, %v1599
        %v1601 = vpop.f32.mrf.mxu0
        %v1602 = vadd.f32 %v724, %v1601
        %1603 = vmatmul.bf16.gmra.mxu0 %v581
        %v1604 = vpop.f32.mrf.mxu0
        %v1605 = vadd.f32 %v724, %v1604
        %v1606 = vpop.f32.mrf.mxu0
        %v1607 = vadd.f32 %v724, %v1606
        %1608 = vmatmul.bf16.gmra.mxu0 %v588
        %v1609 = vpop.f32.mrf.mxu0
        %v1610 = vadd.f32 %v724, %v1609
        %v1611 = vpop.f32.mrf.mxu0
        %v1612 = vadd.f32 %v724, %v1611
        %1613 = vmatmul.bf16.gmra.mxu0 %v595
        %v1614 = vpop.f32.mrf.mxu0
        %v1615 = vadd.f32 %v724, %v1614
        %v1616 = vpop.f32.mrf.mxu0
        %v1617 = vadd.f32 %v724, %v1616
        %1618 = vmatmul.bf16.gmra.mxu0 %v602
        %v1619 = vpop.f32.mrf.mxu0
        %v1620 = vadd.f32 %v724, %v1619
        %v1621 = vpop.f32.mrf.mxu0
        %v1622 = vadd.f32 %v724, %v1621
        %1623 = vmatmul.bf16.gmra.mxu0 %v609
        %v1624 = vpop.f32.mrf.mxu0
        %v1625 = vadd.f32 %v724, %v1624
        %v1626 = vpop.f32.mrf.mxu0
        %v1627 = vadd.f32 %v724, %v1626
        %1628 = vmatmul.bf16.gmra.mxu0 %v616
        %v1629 = vpop.f32.mrf.mxu0
        %v1630 = vadd.f32 %v724, %v1629
        %v1631 = vpop.f32.mrf.mxu0
        %v1632 = vadd.f32 %v724, %v1631
        %1633 = vdwg.mxu0
        %1634 = vmatpush.bf16.msra.mxu0 %v1052
        %1635 = vmatpush.bf16.msra.mxu0 %v1050
        %1636 = vmatpush.bf16.msra.mxu0 %v1048
        %1637 = vmatpush.bf16.msra.mxu0 %v1046
        %1638 = vmatpush.bf16.msra.mxu0 %v1044
        %1639 = vmatpush.bf16.msra.mxu0 %v1042
        %1640 = vmatpush.bf16.msra.mxu0 %v1040
        %1641 = vmatpush.bf16.msra.mxu0 %v1038
        %1642 = vmatmul.bf16.gmra.mxu0 %v568
        %v1643 = vpop.f32.mrf.mxu0
        %v1644 = vadd.f32 %v1595, %v1643
        %v1645 = vpop.f32.mrf.mxu0
        %v1646 = vadd.f32 %v1597, %v1645
        %1647 = vmatmul.bf16.gmra.mxu0 %v575
        %v1648 = vpop.f32.mrf.mxu0
        %v1649 = vadd.f32 %v1600, %v1648
        %v1650 = vpop.f32.mrf.mxu0
        %v1651 = vadd.f32 %v1602, %v1650
        %1652 = vmatmul.bf16.gmra.mxu0 %v582
        %v1653 = vpop.f32.mrf.mxu0
        %v1654 = vadd.f32 %v1605, %v1653
        %v1655 = vpop.f32.mrf.mxu0
        %v1656 = vadd.f32 %v1607, %v1655
        %1657 = vmatmul.bf16.gmra.mxu0 %v589
        %v1658 = vpop.f32.mrf.mxu0
        %v1659 = vadd.f32 %v1610, %v1658
        %v1660 = vpop.f32.mrf.mxu0
        %v1661 = vadd.f32 %v1612, %v1660
        %1662 = vmatmul.bf16.gmra.mxu0 %v596
        %v1663 = vpop.f32.mrf.mxu0
        %v1664 = vadd.f32 %v1615, %v1663
        %v1665 = vpop.f32.mrf.mxu0
        %v1666 = vadd.f32 %v1617, %v1665
        %1667 = vmatmul.bf16.gmra.mxu0 %v603
        %v1668 = vpop.f32.mrf.mxu0
        %v1669 = vadd.f32 %v1620, %v1668
        %v1670 = vpop.f32.mrf.mxu0
        %v1671 = vadd.f32 %v1622, %v1670
        %1672 = vmatmul.bf16.gmra.mxu0 %v610
        %v1673 = vpop.f32.mrf.mxu0
        %v1674 = vadd.f32 %v1625, %v1673
        %v1675 = vpop.f32.mrf.mxu0
        %v1676 = vadd.f32 %v1627, %v1675
        %1677 = vmatmul.bf16.gmra.mxu0 %v617
        %v1678 = vpop.f32.mrf.mxu0
        %v1679 = vadd.f32 %v1630, %v1678
        %v1680 = vpop.f32.mrf.mxu0
        %v1681 = vadd.f32 %v1632, %v1680
        %1682 = vdwg.mxu0
        %1683 = vmatpush.bf16.msra.mxu0 %v1068
        %1684 = vmatpush.bf16.msra.mxu0 %v1066
        %1685 = vmatpush.bf16.msra.mxu0 %v1064
        %1686 = vmatpush.bf16.msra.mxu0 %v1062
        %1687 = vmatpush.bf16.msra.mxu0 %v1060
        %1688 = vmatpush.bf16.msra.mxu0 %v1058
        %1689 = vmatpush.bf16.msra.mxu0 %v1056
        %1690 = vmatpush.bf16.msra.mxu0 %v1054
        %1691 = vmatmul.bf16.gmra.mxu0 %v569
        %v1692 = vpop.f32.mrf.mxu0
        %v1693 = vadd.f32 %v1644, %v1692
        %v1694 = vpop.f32.mrf.mxu0
        %v1695 = vadd.f32 %v1646, %v1694
        %1696 = vmatmul.bf16.gmra.mxu0 %v576
        %v1697 = vpop.f32.mrf.mxu0
        %v1698 = vadd.f32 %v1649, %v1697
        %v1699 = vpop.f32.mrf.mxu0
        %v1700 = vadd.f32 %v1651, %v1699
        %1701 = vmatmul.bf16.gmra.mxu0 %v583
        %v1702 = vpop.f32.mrf.mxu0
        %v1703 = vadd.f32 %v1654, %v1702
        %v1704 = vpop.f32.mrf.mxu0
        %v1705 = vadd.f32 %v1656, %v1704
        %1706 = vmatmul.bf16.gmra.mxu0 %v590
        %v1707 = vpop.f32.mrf.mxu0
        %v1708 = vadd.f32 %v1659, %v1707
        %v1709 = vpop.f32.mrf.mxu0
        %v1710 = vadd.f32 %v1661, %v1709
        %1711 = vmatmul.bf16.gmra.mxu0 %v597
        %v1712 = vpop.f32.mrf.mxu0
        %v1713 = vadd.f32 %v1664, %v1712
        %v1714 = vpop.f32.mrf.mxu0
        %v1715 = vadd.f32 %v1666, %v1714
        %1716 = vmatmul.bf16.gmra.mxu0 %v604
        %v1717 = vpop.f32.mrf.mxu0
        %v1718 = vadd.f32 %v1669, %v1717
        %v1719 = vpop.f32.mrf.mxu0
        %v1720 = vadd.f32 %v1671, %v1719
        %1721 = vmatmul.bf16.gmra.mxu0 %v611
        %v1722 = vpop.f32.mrf.mxu0
        %v1723 = vadd.f32 %v1674, %v1722
        %v1724 = vpop.f32.mrf.mxu0
        %v1725 = vadd.f32 %v1676, %v1724
        %1726 = vmatmul.bf16.gmra.mxu0 %v618
        %v1727 = vpop.f32.mrf.mxu0
        %v1728 = vadd.f32 %v1679, %v1727
        %v1729 = vpop.f32.mrf.mxu0
        %v1730 = vadd.f32 %v1681, %v1729
        %1731 = vdwg.mxu0
        %1732 = vmatpush.bf16.msra.mxu0 %v1084
        %1733 = vmatpush.bf16.msra.mxu0 %v1082
        %1734 = vmatpush.bf16.msra.mxu0 %v1080
        %1735 = vmatpush.bf16.msra.mxu0 %v1078
        %1736 = vmatpush.bf16.msra.mxu0 %v1076
        %1737 = vmatpush.bf16.msra.mxu0 %v1074
        %1738 = vmatpush.bf16.msra.mxu0 %v1072
        %1739 = vmatpush.bf16.msra.mxu0 %v1070
        %1740 = vmatmul.bf16.gmra.mxu0 %v570
        %v1741 = vpop.f32.mrf.mxu0
        %v1742 = vadd.f32 %v1693, %v1741
        %v1743 = vpop.f32.mrf.mxu0
        %v1744 = vadd.f32 %v1695, %v1743
        %1745 = vmatmul.bf16.gmra.mxu0 %v577
        %v1746 = vpop.f32.mrf.mxu0
        %v1747 = vadd.f32 %v1698, %v1746
        %v1748 = vpop.f32.mrf.mxu0
        %v1749 = vadd.f32 %v1700, %v1748
        %1750 = vmatmul.bf16.gmra.mxu0 %v584
        %v1751 = vpop.f32.mrf.mxu0
        %v1752 = vadd.f32 %v1703, %v1751
        %v1753 = vpop.f32.mrf.mxu0
        %v1754 = vadd.f32 %v1705, %v1753
        %1755 = vmatmul.bf16.gmra.mxu0 %v591
        %v1756 = vpop.f32.mrf.mxu0
        %v1757 = vadd.f32 %v1708, %v1756
        %v1758 = vpop.f32.mrf.mxu0
        %v1759 = vadd.f32 %v1710, %v1758
        %1760 = vmatmul.bf16.gmra.mxu0 %v598
        %v1761 = vpop.f32.mrf.mxu0
        %v1762 = vadd.f32 %v1713, %v1761
        %v1763 = vpop.f32.mrf.mxu0
        %v1764 = vadd.f32 %v1715, %v1763
        %1765 = vmatmul.bf16.gmra.mxu0 %v605
        %v1766 = vpop.f32.mrf.mxu0
        %v1767 = vadd.f32 %v1718, %v1766
        %v1768 = vpop.f32.mrf.mxu0
        %v1769 = vadd.f32 %v1720, %v1768
        %1770 = vmatmul.bf16.gmra.mxu0 %v612
        %v1771 = vpop.f32.mrf.mxu0
        %v1772 = vadd.f32 %v1723, %v1771
        %v1773 = vpop.f32.mrf.mxu0
        %v1774 = vadd.f32 %v1725, %v1773
        %1775 = vmatmul.bf16.gmra.mxu0 %v619
        %v1776 = vpop.f32.mrf.mxu0
        %v1777 = vadd.f32 %v1728, %v1776
        %v1778 = vpop.f32.mrf.mxu0
        %v1779 = vadd.f32 %v1730, %v1778
        %1780 = vdwg.mxu0
        %1781 = vmatpush.bf16.msra.mxu0 %v1100
        %1782 = vmatpush.bf16.msra.mxu0 %v1098
        %1783 = vmatpush.bf16.msra.mxu0 %v1096
        %1784 = vmatpush.bf16.msra.mxu0 %v1094
        %1785 = vmatpush.bf16.msra.mxu0 %v1092
        %1786 = vmatpush.bf16.msra.mxu0 %v1090
        %1787 = vmatpush.bf16.msra.mxu0 %v1088
        %1788 = vmatpush.bf16.msra.mxu0 %v1086
        %1789 = vmatmul.bf16.gmra.mxu0 %v571
        %v1790 = vpop.f32.mrf.mxu0
        %v1791 = vadd.f32 %v1742, %v1790
        %v1792 = vpop.f32.mrf.mxu0
        %v1793 = vadd.f32 %v1744, %v1792
        %1794 = vmatmul.bf16.gmra.mxu0 %v578
        %v1795 = vpop.f32.mrf.mxu0
        %v1796 = vadd.f32 %v1747, %v1795
        %v1797 = vpop.f32.mrf.mxu0
        %v1798 = vadd.f32 %v1749, %v1797
        %1799 = vmatmul.bf16.gmra.mxu0 %v585
        %v1800 = vpop.f32.mrf.mxu0
        %v1801 = vadd.f32 %v1752, %v1800
        %v1802 = vpop.f32.mrf.mxu0
        %v1803 = vadd.f32 %v1754, %v1802
        %1804 = vmatmul.bf16.gmra.mxu0 %v592
        %v1805 = vpop.f32.mrf.mxu0
        %v1806 = vadd.f32 %v1757, %v1805
        %v1807 = vpop.f32.mrf.mxu0
        %v1808 = vadd.f32 %v1759, %v1807
        %1809 = vmatmul.bf16.gmra.mxu0 %v599
        %v1810 = vpop.f32.mrf.mxu0
        %v1811 = vadd.f32 %v1762, %v1810
        %v1812 = vpop.f32.mrf.mxu0
        %v1813 = vadd.f32 %v1764, %v1812
        %1814 = vmatmul.bf16.gmra.mxu0 %v606
        %v1815 = vpop.f32.mrf.mxu0
        %v1816 = vadd.f32 %v1767, %v1815
        %v1817 = vpop.f32.mrf.mxu0
        %v1818 = vadd.f32 %v1769, %v1817
        %1819 = vmatmul.bf16.gmra.mxu0 %v613
        %v1820 = vpop.f32.mrf.mxu0
        %v1821 = vadd.f32 %v1772, %v1820
        %v1822 = vpop.f32.mrf.mxu0
        %v1823 = vadd.f32 %v1774, %v1822
        %1824 = vmatmul.bf16.gmra.mxu0 %v620
        %v1825 = vpop.f32.mrf.mxu0
        %v1826 = vadd.f32 %v1777, %v1825
        %v1827 = vpop.f32.mrf.mxu0
        %v1828 = vadd.f32 %v1779, %v1827
        %1829 = vdwg.mxu0
        %1830 = vmatpush.bf16.msra.mxu0 %v1116
        %1831 = vmatpush.bf16.msra.mxu0 %v1114
        %1832 = vmatpush.bf16.msra.mxu0 %v1112
        %1833 = vmatpush.bf16.msra.mxu0 %v1110
        %1834 = vmatpush.bf16.msra.mxu0 %v1108
        %1835 = vmatpush.bf16.msra.mxu0 %v1106
        %1836 = vmatpush.bf16.msra.mxu0 %v1104
        %1837 = vmatpush.bf16.msra.mxu0 %v1102
        %1838 = vmatmul.bf16.gmra.mxu0 %v572
        %v1839 = vpop.f32.mrf.mxu0
        %v1840 = vadd.f32 %v1791, %v1839
        %v1841 = vpop.f32.mrf.mxu0
        %v1842 = vadd.f32 %v1793, %v1841
        %1843 = vmatmul.bf16.gmra.mxu0 %v579
        %v1844 = vpop.f32.mrf.mxu0
        %v1845 = vadd.f32 %v1796, %v1844
        %v1846 = vpop.f32.mrf.mxu0
        %v1847 = vadd.f32 %v1798, %v1846
        %1848 = vmatmul.bf16.gmra.mxu0 %v586
        %v1849 = vpop.f32.mrf.mxu0
        %v1850 = vadd.f32 %v1801, %v1849
        %v1851 = vpop.f32.mrf.mxu0
        %v1852 = vadd.f32 %v1803, %v1851
        %1853 = vmatmul.bf16.gmra.mxu0 %v593
        %v1854 = vpop.f32.mrf.mxu0
        %v1855 = vadd.f32 %v1806, %v1854
        %v1856 = vpop.f32.mrf.mxu0
        %v1857 = vadd.f32 %v1808, %v1856
        %1858 = vmatmul.bf16.gmra.mxu0 %v600
        %v1859 = vpop.f32.mrf.mxu0
        %v1860 = vadd.f32 %v1811, %v1859
        %v1861 = vpop.f32.mrf.mxu0
        %v1862 = vadd.f32 %v1813, %v1861
        %1863 = vmatmul.bf16.gmra.mxu0 %v607
        %v1864 = vpop.f32.mrf.mxu0
        %v1865 = vadd.f32 %v1816, %v1864
        %v1866 = vpop.f32.mrf.mxu0
        %v1867 = vadd.f32 %v1818, %v1866
        %1868 = vmatmul.bf16.gmra.mxu0 %v614
        %v1869 = vpop.f32.mrf.mxu0
        %v1870 = vadd.f32 %v1821, %v1869
        %v1871 = vpop.f32.mrf.mxu0
        %v1872 = vadd.f32 %v1823, %v1871
        %1873 = vmatmul.bf16.gmra.mxu0 %v621
        %v1874 = vpop.f32.mrf.mxu0
        %v1875 = vadd.f32 %v1826, %v1874
        %v1876 = vpop.f32.mrf.mxu0
        %v1877 = vadd.f32 %v1828, %v1876
        %1878 = vdwg.mxu0
        %1879 = vmatpush.bf16.msra.mxu0 0
        %1880 = vmatpush.bf16.msra.mxu0 0
        %1881 = vmatpush.bf16.msra.mxu0 0
        %1882 = vmatpush.bf16.msra.mxu0 0
        %1883 = vmatpush.bf16.msra.mxu0 0
        %1884 = vmatpush.bf16.msra.mxu0 0
        %1885 = vmatpush.bf16.msra.mxu0 0
        %1886 = vmatpush.bf16.msra.mxu0 %v1118
        %1887 = vmatmul.bf16.gmra.mxu0 %v1219
        %v1888 = vpop.f32.mrf.mxu0
        %v1889 = vadd.f32 %v1840, %v1888
        %v1890 = vpop.f32.mrf.mxu0
        %v1891 = vadd.f32 %v1842, %v1890
        %1892 = vmatmul.bf16.gmra.mxu0 %v1222
        %v1893 = vpop.f32.mrf.mxu0
        %v1894 = vadd.f32 %v1845, %v1893
        %v1895 = vpop.f32.mrf.mxu0
        %v1896 = vadd.f32 %v1847, %v1895
        %1897 = vmatmul.bf16.gmra.mxu0 %v1225
        %v1898 = vpop.f32.mrf.mxu0
        %v1899 = vadd.f32 %v1850, %v1898
        %v1900 = vpop.f32.mrf.mxu0
        %v1901 = vadd.f32 %v1852, %v1900
        %1902 = vmatmul.bf16.gmra.mxu0 %v1228
        %v1903 = vpop.f32.mrf.mxu0
        %v1904 = vadd.f32 %v1855, %v1903
        %v1905 = vpop.f32.mrf.mxu0
        %v1906 = vadd.f32 %v1857, %v1905
        %1907 = vmatmul.bf16.gmra.mxu0 %v1231
        %v1908 = vpop.f32.mrf.mxu0
        %v1909 = vadd.f32 %v1860, %v1908
        %v1910 = vpop.f32.mrf.mxu0
        %v1911 = vadd.f32 %v1862, %v1910
        %1912 = vmatmul.bf16.gmra.mxu0 %v1234
        %v1913 = vpop.f32.mrf.mxu0
        %v1914 = vadd.f32 %v1865, %v1913
        %v1915 = vpop.f32.mrf.mxu0
        %v1916 = vadd.f32 %v1867, %v1915
        %1917 = vmatmul.bf16.gmra.mxu0 %v1237
        %v1918 = vpop.f32.mrf.mxu0
        %v1919 = vadd.f32 %v1870, %v1918
        %v1920 = vpop.f32.mrf.mxu0
        %v1921 = vadd.f32 %v1872, %v1920
        %1922 = vmatmul.bf16.gmra.mxu0 %v1240
        %v1923 = vpop.f32.mrf.mxu0
        %v1924 = vadd.f32 %v1875, %v1923
        %v1925 = vpop.f32.mrf.mxu0
        %v1926 = vadd.f32 %v1877, %v1925
        %1927 = vdwg.mxu0
        %v1928 = vmax.f32 %v1546, 0.0
        %v1929 = vmax.f32 %v1889, 0.0
        %v1930 = vmax.f32 %v1548, 0.0
        %v1931 = vmax.f32 %v1891, 0.0
        %v1932 = vmax.f32 %v1551, 0.0
        %v1933 = vmax.f32 %v1894, 0.0
        %v1934 = vmax.f32 %v1553, 0.0
        %v1935 = vmax.f32 %v1896, 0.0
        %v1936 = vmax.f32 %v1556, 0.0
        %v1937 = vmax.f32 %v1899, 0.0
        %v1938 = vmax.f32 %v1558, 0.0
        %v1939 = vmax.f32 %v1901, 0.0
        %v1940 = vmax.f32 %v1561, 0.0
        %v1941 = vmax.f32 %v1904, 0.0
        %v1942 = vmax.f32 %v1563, 0.0
        %v1943 = vmax.f32 %v1906, 0.0
        %v1944 = vmax.f32 %v1566, 0.0
        %v1945 = vmax.f32 %v1909, 0.0
        %v1946 = vmax.f32 %v1568, 0.0
        %v1947 = vmax.f32 %v1911, 0.0
        %v1948 = vmax.f32 %v1571, 0.0
        %v1949 = vmax.f32 %v1914, 0.0
        %v1950 = vmax.f32 %v1573, 0.0
        %v1951 = vmax.f32 %v1916, 0.0
        %v1952 = vmax.f32 %v1576, 0.0
        %v1953 = vmax.f32 %v1919, 0.0
        %v1954 = vmax.f32 %v1578, 0.0
        %v1955 = vmax.f32 %v1921, 0.0
        %v1956 = vmax.f32 %v1581, 0.0
        %v1957 = vmax.f32 %v1924, 0.0
        %v1958 = vmax.f32 %v1583, 0.0
        %v1959 = vmax.f32 %v1926, 0.0
        %v1960 = vpack.c.bf16 %v1930, %v1928
        %v1961 = vpack.c.bf16 %v1931, %v1929
        %v1962 = vpack.c.bf16 %v1934, %v1932
        %v1963 = vpack.c.bf16 %v1935, %v1933
        %v1964 = vpack.c.bf16 %v1938, %v1936
        %v1965 = vpack.c.bf16 %v1939, %v1937
        %v1966 = vpack.c.bf16 %v1942, %v1940
        %v1967 = vpack.c.bf16 %v1943, %v1941
        %v1968 = vpack.c.bf16 %v1946, %v1944
        %v1969 = vpack.c.bf16 %v1947, %v1945
        %v1970 = vpack.c.bf16 %v1950, %v1948
        %v1971 = vpack.c.bf16 %v1951, %v1949
        %v1972 = vpack.c.bf16 %v1954, %v1952
        %v1973 = vpack.c.bf16 %v1955, %v1953
        %v1974 = vpack.c.bf16 %v1958, %v1956
        %v1975 = vpack.c.bf16 %v1959, %v1957
        %v1976 = vld [vmem:[#allocation8] sm:$0xf]
        %v1977 = vld [vmem:[#allocation8 + $0x4] sm:$0xf]
        %v1978 = vld [vmem:[#allocation8 + $0x8] sm:$0xf]
        %v1979 = vld [vmem:[#allocation8 + $0xc] sm:$0xf]
        %v1980 = vld [vmem:[#allocation8 + $0x10] sm:$0xf]
        %v1981 = vld [vmem:[#allocation8 + $0x14] sm:$0xf]
        %v1982 = vld [vmem:[#allocation8 + $0x18] sm:$0xf]
        %v1983 = vld [vmem:[#allocation8 + $0x1c] sm:$0xf]
        %v1984 = vld [vmem:[#allocation8 + $0x20] sm:$0xf]
        %v1985 = vld [vmem:[#allocation8 + $0x24] sm:$0xf]
        %v1986 = vld [vmem:[#allocation8 + $0x28] sm:$0xf]
        %v1987 = vld [vmem:[#allocation8 + $0x2c] sm:$0xf]
        %v1988 = vld [vmem:[#allocation8 + $0x30] sm:$0xf]
        %v1989 = vld [vmem:[#allocation8 + $0x34] sm:$0xf]
        %v1990 = vld [vmem:[#allocation8 + $0x38] sm:$0xf]
        %v1991 = vld [vmem:[#allocation8 + $0x3c] sm:$0xf]
        %v1992 = vld [vmem:[#allocation8 + $0x40] sm:$0xf]
        %v1993 = vld [vmem:[#allocation8 + $0x44] sm:$0xf]
        %v1994 = vld [vmem:[#allocation8 + $0x48] sm:$0xf]
        %v1995 = vld [vmem:[#allocation8 + $0x4c] sm:$0xf]
        %v1996 = vld [vmem:[#allocation8 + $0x50] sm:$0xf]
        %v1997 = vld [vmem:[#allocation8 + $0x54] sm:$0xf]
        %v1998 = vld [vmem:[#allocation8 + $0x58] sm:$0xf]
        %v1999 = vld [vmem:[#allocation8 + $0x5c] sm:$0xf]
        %v2000 = vld [vmem:[#allocation8 + $0x60] sm:$0xf]
        %v2001 = vld [vmem:[#allocation8 + $0x64] sm:$0xf]
        %v2002 = vld [vmem:[#allocation8 + $0x68] sm:$0xf]
        %v2003 = vld [vmem:[#allocation8 + $0x6c] sm:$0xf]
        %v2004 = vld [vmem:[#allocation8 + $0x70] sm:$0xf]
        %v2005 = vld [vmem:[#allocation8 + $0x74] sm:$0xf]
        %v2006 = vld [vmem:[#allocation8 + $0x78] sm:$0xf]
        %v2007 = vld [vmem:[#allocation8 + $0x7c] sm:$0xf]
        %v2008 = vld [vmem:[%s4] sm:$0x1]
        %v2010 = vperm.slane %v2008, 0
        %v2044 = vunpack.c.l.b16 %v1976
        %v2045 = vunpack.c.l.b16 %v1977
        %v2046 = vunpack.c.l.b16 %v1978
        %v2047 = vunpack.c.l.b16 %v1979
        %v2048 = vunpack.c.l.b16 %v1980
        %v2049 = vunpack.c.l.b16 %v1981
        %v2050 = vunpack.c.l.b16 %v1982
        %v2051 = vunpack.c.l.b16 %v1983
        %v2052 = vunpack.c.l.b16 %v1984
        %v2053 = vunpack.c.l.b16 %v1985
        %v2054 = vunpack.c.l.b16 %v1986
        %v2055 = vunpack.c.l.b16 %v1987
        %v2056 = vunpack.c.l.b16 %v1988
        %v2057 = vunpack.c.l.b16 %v1989
        %v2058 = vunpack.c.l.b16 %v1990
        %v2059 = vunpack.c.l.b16 %v1991
        %v2060 = vunpack.c.l.b16 %v1992
        %v2061 = vunpack.c.l.b16 %v1993
        %v2062 = vunpack.c.l.b16 %v1994
        %v2063 = vunpack.c.l.b16 %v1995
        %v2064 = vunpack.c.l.b16 %v1996
        %v2065 = vunpack.c.l.b16 %v1997
        %v2066 = vunpack.c.l.b16 %v1998
        %v2067 = vunpack.c.l.b16 %v1999
        %v2068 = vunpack.c.l.b16 %v2000
        %v2069 = vunpack.c.l.b16 %v2001
        %v2070 = vunpack.c.l.b16 %v2002
        %v2071 = vunpack.c.l.b16 %v2003
        %v2072 = vunpack.c.l.b16 %v2004
        %v2073 = vunpack.c.l.b16 %v2005
        %v2074 = vunpack.c.l.b16 %v2006
        %v2075 = vunpack.c.l.b16 %v2007
        %v2076 = vpack.c.b16 %v2045, %v2044
        %v2077 = vpack.c.b16 %v2047, %v2046
        %v2078 = vpack.c.b16 %v2049, %v2048
        %v2079 = vpack.c.b16 %v2051, %v2050
        %v2080 = vpack.c.b16 %v2053, %v2052
        %v2081 = vpack.c.b16 %v2055, %v2054
        %v2082 = vpack.c.b16 %v2057, %v2056
        %v2083 = vpack.c.b16 %v2059, %v2058
        %v2084 = vpack.c.b16 %v2061, %v2060
        %v2085 = vpack.c.b16 %v2063, %v2062
        %v2086 = vpack.c.b16 %v2065, %v2064
        %v2087 = vpack.c.b16 %v2067, %v2066
        %v2088 = vpack.c.b16 %v2069, %v2068
        %v2089 = vpack.c.b16 %v2071, %v2070
        %v2090 = vpack.c.b16 %v2073, %v2072
        %v2091 = vpack.c.b16 %v2075, %v2074
        %2108 = vmatpush.bf16.msra.mxu0 %v2083
        %2109 = vmatpush.bf16.msra.mxu0 %v2082
        %2110 = vmatpush.bf16.msra.mxu0 %v2081
        %2111 = vmatpush.bf16.msra.mxu0 %v2080
        %2112 = vmatpush.bf16.msra.mxu0 %v2079
        %2113 = vmatpush.bf16.msra.mxu0 %v2078
        %2114 = vmatpush.bf16.msra.mxu0 %v2077
        %2115 = vmatpush.bf16.msra.mxu0 %v2076
        %2116 = vmatmul.bf16.gmra.mxu0 %v1960
        %v2117 = vpop.f32.mrf.mxu0
        %v2118 = vadd.f32 %v2010, %v2117
        %v2119 = vpop.f32.mrf.mxu0
        %v2120 = vadd.f32 %v2010, %v2119
        %2121 = vmatmul.bf16.gmra.mxu0 %v1962
        %v2122 = vpop.f32.mrf.mxu0
        %v2123 = vadd.f32 %v2010, %v2122
        %v2124 = vpop.f32.mrf.mxu0
        %v2125 = vadd.f32 %v2010, %v2124
        %2126 = vmatmul.bf16.gmra.mxu0 %v1964
        %v2127 = vpop.f32.mrf.mxu0
        %v2128 = vadd.f32 %v2010, %v2127
        %v2129 = vpop.f32.mrf.mxu0
        %v2130 = vadd.f32 %v2010, %v2129
        %2131 = vmatmul.bf16.gmra.mxu0 %v1966
        %v2132 = vpop.f32.mrf.mxu0
        %v2133 = vadd.f32 %v2010, %v2132
        %v2134 = vpop.f32.mrf.mxu0
        %v2135 = vadd.f32 %v2010, %v2134
        %2136 = vmatmul.bf16.gmra.mxu0 %v1968
        %v2137 = vpop.f32.mrf.mxu0
        %v2138 = vadd.f32 %v2010, %v2137
        %v2139 = vpop.f32.mrf.mxu0
        %v2140 = vadd.f32 %v2010, %v2139
        %2141 = vmatmul.bf16.gmra.mxu0 %v1970
        %v2142 = vpop.f32.mrf.mxu0
        %v2143 = vadd.f32 %v2010, %v2142
        %v2144 = vpop.f32.mrf.mxu0
        %v2145 = vadd.f32 %v2010, %v2144
        %2146 = vmatmul.bf16.gmra.mxu0 %v1972
        %v2147 = vpop.f32.mrf.mxu0
        %v2148 = vadd.f32 %v2010, %v2147
        %v2149 = vpop.f32.mrf.mxu0
        %v2150 = vadd.f32 %v2010, %v2149
        %2151 = vmatmul.bf16.gmra.mxu0 %v1974
        %v2152 = vpop.f32.mrf.mxu0
        %v2153 = vadd.f32 %v2010, %v2152
        %v2154 = vpop.f32.mrf.mxu0
        %v2155 = vadd.f32 %v2010, %v2154
        %2156 = vdwg.mxu0
        %2157 = vmatpush.bf16.msra.mxu0 %v2091
        %2158 = vmatpush.bf16.msra.mxu0 %v2090
        %2159 = vmatpush.bf16.msra.mxu0 %v2089
        %2160 = vmatpush.bf16.msra.mxu0 %v2088
        %2161 = vmatpush.bf16.msra.mxu0 %v2087
        %2162 = vmatpush.bf16.msra.mxu0 %v2086
        %2163 = vmatpush.bf16.msra.mxu0 %v2085
        %2164 = vmatpush.bf16.msra.mxu0 %v2084
        %2165 = vmatmul.bf16.gmra.mxu0 %v1961
        %v2166 = vpop.f32.mrf.mxu0
        %v2167 = vadd.f32 %v2118, %v2166
        %v2168 = vpop.f32.mrf.mxu0
        %v2169 = vadd.f32 %v2120, %v2168
        %2170 = vmatmul.bf16.gmra.mxu0 %v1963
        %v2171 = vpop.f32.mrf.mxu0
        %v2172 = vadd.f32 %v2123, %v2171
        %v2173 = vpop.f32.mrf.mxu0
        %v2174 = vadd.f32 %v2125, %v2173
        %2175 = vmatmul.bf16.gmra.mxu0 %v1965
        %v2176 = vpop.f32.mrf.mxu0
        %v2177 = vadd.f32 %v2128, %v2176
        %v2178 = vpop.f32.mrf.mxu0
        %v2179 = vadd.f32 %v2130, %v2178
        %2180 = vmatmul.bf16.gmra.mxu0 %v1967
        %v2181 = vpop.f32.mrf.mxu0
        %v2182 = vadd.f32 %v2133, %v2181
        %v2183 = vpop.f32.mrf.mxu0
        %v2184 = vadd.f32 %v2135, %v2183
        %2185 = vmatmul.bf16.gmra.mxu0 %v1969
        %v2186 = vpop.f32.mrf.mxu0
        %v2187 = vadd.f32 %v2138, %v2186
        %v2188 = vpop.f32.mrf.mxu0
        %v2189 = vadd.f32 %v2140, %v2188
        %2190 = vmatmul.bf16.gmra.mxu0 %v1971
        %v2191 = vpop.f32.mrf.mxu0
        %v2192 = vadd.f32 %v2143, %v2191
        %v2193 = vpop.f32.mrf.mxu0
        %v2194 = vadd.f32 %v2145, %v2193
        %2195 = vmatmul.bf16.gmra.mxu0 %v1973
        %v2196 = vpop.f32.mrf.mxu0
        %v2197 = vadd.f32 %v2148, %v2196
        %v2198 = vpop.f32.mrf.mxu0
        %v2199 = vadd.f32 %v2150, %v2198
        %2200 = vmatmul.bf16.gmra.mxu0 %v1975
        %v2201 = vpop.f32.mrf.mxu0
        %v2202 = vadd.f32 %v2153, %v2201
        %v2203 = vpop.f32.mrf.mxu0
        %v2204 = vadd.f32 %v2155, %v2203
        %2205 = vdwg.mxu0
        %v2206 = vmax.f32 %v2167, 0.0
        %v2207 = vmax.f32 %v2169, 0.0
        %v2208 = vmax.f32 %v2172, 0.0
        %v2209 = vmax.f32 %v2174, 0.0
        %v2210 = vmax.f32 %v2177, 0.0
        %v2211 = vmax.f32 %v2179, 0.0
        %v2212 = vmax.f32 %v2182, 0.0
        %v2213 = vmax.f32 %v2184, 0.0
        %v2214 = vmax.f32 %v2187, 0.0
        %v2215 = vmax.f32 %v2189, 0.0
        %v2216 = vmax.f32 %v2192, 0.0
        %v2217 = vmax.f32 %v2194, 0.0
        %v2218 = vmax.f32 %v2197, 0.0
        %v2219 = vmax.f32 %v2199, 0.0
        %v2220 = vmax.f32 %v2202, 0.0
        %v2221 = vmax.f32 %v2204, 0.0
        %v2222 = vpack.c.bf16 %v2207, %v2206
        %v2223 = vpack.c.bf16 %v2209, %v2208
        %v2224 = vpack.c.bf16 %v2211, %v2210
        %v2225 = vpack.c.bf16 %v2213, %v2212
        %v2226 = vpack.c.bf16 %v2215, %v2214
        %v2227 = vpack.c.bf16 %v2217, %v2216
        %v2228 = vpack.c.bf16 %v2219, %v2218
        %v2229 = vpack.c.bf16 %v2221, %v2220
        %v2230 = vld [vmem:[#allocation10] sm:$0xf]
        %v2231 = vld [vmem:[#allocation10 + $0x4] sm:$0xf]
        %v2232 = vld [vmem:[#allocation10 + $0x8] sm:$0xf]
        %v2233 = vld [vmem:[#allocation10 + $0xc] sm:$0xf]
        %v2234 = vld [vmem:[#allocation10 + $0x10] sm:$0xf]
        %v2235 = vld [vmem:[#allocation10 + $0x14] sm:$0xf]
        %v2236 = vld [vmem:[#allocation10 + $0x18] sm:$0xf]
        %v2237 = vld [vmem:[#allocation10 + $0x1c] sm:$0xf]
        %v2238 = vld [vmem:[#allocation10 + $0x20] sm:$0xf]
        %v2239 = vld [vmem:[#allocation10 + $0x24] sm:$0xf]
        %v2240 = vld [vmem:[#allocation10 + $0x28] sm:$0xf]
        %v2241 = vld [vmem:[#allocation10 + $0x2c] sm:$0xf]
        %v2242 = vld [vmem:[#allocation10 + $0x30] sm:$0xf]
        %v2243 = vld [vmem:[#allocation10 + $0x34] sm:$0xf]
        %v2244 = vld [vmem:[#allocation10 + $0x38] sm:$0xf]
        %v2245 = vld [vmem:[#allocation10 + $0x3c] sm:$0xf]
        %v2246 = vld [vmem:[%s6] sm:$0x1]
        %v2248 = vperm.slane %v2246, 0
        %v2266 = vunpack.c.l.b16 %v2230
        %v2267 = vunpack.c.l.b16 %v2231
        %v2268 = vunpack.c.l.b16 %v2232
        %v2269 = vunpack.c.l.b16 %v2233
        %v2270 = vunpack.c.l.b16 %v2234
        %v2271 = vunpack.c.l.b16 %v2235
        %v2272 = vunpack.c.l.b16 %v2236
        %v2273 = vunpack.c.l.b16 %v2237
        %v2274 = vunpack.c.l.b16 %v2238
        %v2275 = vunpack.c.l.b16 %v2239
        %v2276 = vunpack.c.l.b16 %v2240
        %v2277 = vunpack.c.l.b16 %v2241
        %v2278 = vunpack.c.l.b16 %v2242
        %v2279 = vunpack.c.l.b16 %v2243
        %v2280 = vunpack.c.l.b16 %v2244
        %v2281 = vunpack.c.l.b16 %v2245
        %v2282 = vpack.c.b16 %v2267, %v2266
        %v2283 = vpack.c.b16 %v2269, %v2268
        %v2284 = vpack.c.b16 %v2271, %v2270
        %v2285 = vpack.c.b16 %v2273, %v2272
        %v2286 = vpack.c.b16 %v2275, %v2274
        %v2287 = vpack.c.b16 %v2277, %v2276
        %v2288 = vpack.c.b16 %v2279, %v2278
        %v2289 = vpack.c.b16 %v2281, %v2280
        %2298 = vmatpush.bf16.msra.mxu0 %v2289
        %2299 = vmatpush.bf16.msra.mxu0 %v2288
        %2300 = vmatpush.bf16.msra.mxu0 %v2287
        %2301 = vmatpush.bf16.msra.mxu0 %v2286
        %2302 = vmatpush.bf16.msra.mxu0 %v2285
        %2303 = vmatpush.bf16.msra.mxu0 %v2284
        %2304 = vmatpush.bf16.msra.mxu0 %v2283
        %2305 = vmatpush.bf16.msra.mxu0 %v2282
        %2306 = vmatmul.bf16.gmra.mxu0 %v2222
        %v2307 = vpop.f32.mrf.mxu0
        %v2308 = vadd.f32 %v2248, %v2307
        %v2309 = vpop.f32.mrf.mxu0
        %v2310 = vadd.f32 %v2248, %v2309
        %2311 = vmatmul.bf16.gmra.mxu0 %v2223
        %v2312 = vpop.f32.mrf.mxu0
        %v2313 = vadd.f32 %v2248, %v2312
        %v2314 = vpop.f32.mrf.mxu0
        %v2315 = vadd.f32 %v2248, %v2314
        %2316 = vmatmul.bf16.gmra.mxu0 %v2224
        %v2317 = vpop.f32.mrf.mxu0
        %v2318 = vadd.f32 %v2248, %v2317
        %v2319 = vpop.f32.mrf.mxu0
        %v2320 = vadd.f32 %v2248, %v2319
        %2321 = vmatmul.bf16.gmra.mxu0 %v2225
        %v2322 = vpop.f32.mrf.mxu0
        %v2323 = vadd.f32 %v2248, %v2322
        %v2324 = vpop.f32.mrf.mxu0
        %v2325 = vadd.f32 %v2248, %v2324
        %2326 = vmatmul.bf16.gmra.mxu0 %v2226
        %v2327 = vpop.f32.mrf.mxu0
        %v2328 = vadd.f32 %v2248, %v2327
        %v2329 = vpop.f32.mrf.mxu0
        %v2330 = vadd.f32 %v2248, %v2329
        %2331 = vmatmul.bf16.gmra.mxu0 %v2227
        %v2332 = vpop.f32.mrf.mxu0
        %v2333 = vadd.f32 %v2248, %v2332
        %v2334 = vpop.f32.mrf.mxu0
        %v2335 = vadd.f32 %v2248, %v2334
        %2336 = vmatmul.bf16.gmra.mxu0 %v2228
        %v2337 = vpop.f32.mrf.mxu0
        %v2338 = vadd.f32 %v2248, %v2337
        %v2339 = vpop.f32.mrf.mxu0
        %v2340 = vadd.f32 %v2248, %v2339
        %2341 = vmatmul.bf16.gmra.mxu0 %v2229
        %v2342 = vpop.f32.mrf.mxu0
        %v2343 = vadd.f32 %v2248, %v2342
        %v2344 = vpop.f32.mrf.mxu0
        %v2345 = vadd.f32 %v2248, %v2344
        %2346 = vdwg.mxu0
        %v2347 = vmax.f32 %v2308, 0.0
        %v2348 = vmax.f32 %v2310, 0.0
        %v2349 = vmax.f32 %v2313, 0.0
        %v2350 = vmax.f32 %v2315, 0.0
        %v2351 = vmax.f32 %v2318, 0.0
        %v2352 = vmax.f32 %v2320, 0.0
        %v2353 = vmax.f32 %v2323, 0.0
        %v2354 = vmax.f32 %v2325, 0.0
        %v2355 = vmax.f32 %v2328, 0.0
        %v2356 = vmax.f32 %v2330, 0.0
        %v2357 = vmax.f32 %v2333, 0.0
        %v2358 = vmax.f32 %v2335, 0.0
        %v2359 = vmax.f32 %v2338, 0.0
        %v2360 = vmax.f32 %v2340, 0.0
        %v2361 = vmax.f32 %v2343, 0.0
        %v2362 = vmax.f32 %v2345, 0.0
        %v2363 = vpack.c.bf16 %v2348, %v2347
        %v2364 = vpack.c.bf16 %v2350, %v2349
        %v2365 = vpack.c.bf16 %v2352, %v2351
        %v2366 = vpack.c.bf16 %v2354, %v2353
        %v2367 = vpack.c.bf16 %v2356, %v2355
        %v2368 = vpack.c.bf16 %v2358, %v2357
        %v2369 = vpack.c.bf16 %v2360, %v2359
        %v2370 = vpack.c.bf16 %v2362, %v2361
        %v2371 = vld [vmem:[#allocation11] sm:$0xf]
        %v2372 = vld [vmem:[#allocation11 + $0x4] sm:$0xf]
        %v2373 = vld [vmem:[#allocation11 + $0x8] sm:$0xf]
        %v2374 = vld [vmem:[#allocation11 + $0xc] sm:$0xf]
        %v2375 = vld [vmem:[#allocation11 + $0x10] sm:$0xf]
        %v2376 = vld [vmem:[#allocation11 + $0x14] sm:$0xf]
        %v2377 = vld [vmem:[#allocation11 + $0x18] sm:$0xf]
        %v2378 = vld [vmem:[#allocation11 + $0x1c] sm:$0xf]
        %v2379 = vld [vmem:[#allocation11 + $0x20] sm:$0xf]
        %v2380 = vld [vmem:[#allocation11 + $0x24] sm:$0xf]
        %v2381 = vld [vmem:[#allocation11 + $0x28] sm:$0xf]
        %v2382 = vld [vmem:[#allocation11 + $0x2c] sm:$0xf]
        %v2383 = vld [vmem:[#allocation11 + $0x30] sm:$0xf]
        %v2384 = vld [vmem:[#allocation11 + $0x34] sm:$0xf]
        %v2385 = vld [vmem:[#allocation11 + $0x38] sm:$0xf]
        %v2386 = vld [vmem:[#allocation11 + $0x3c] sm:$0xf]
        %v2387 = vld [vmem:[%s8] sm:$0x1]
        %v2389 = vperm.slane %v2387, 0
        %v2407 = vunpack.c.l.b16 %v2371
        %v2408 = vunpack.c.l.b16 %v2372
        %v2409 = vunpack.c.l.b16 %v2373
        %v2410 = vunpack.c.l.b16 %v2374
        %v2411 = vunpack.c.l.b16 %v2375
        %v2412 = vunpack.c.l.b16 %v2376
        %v2413 = vunpack.c.l.b16 %v2377
        %v2414 = vunpack.c.l.b16 %v2378
        %v2415 = vunpack.c.l.b16 %v2379
        %v2416 = vunpack.c.l.b16 %v2380
        %v2417 = vunpack.c.l.b16 %v2381
        %v2418 = vunpack.c.l.b16 %v2382
        %v2419 = vunpack.c.l.b16 %v2383
        %v2420 = vunpack.c.l.b16 %v2384
        %v2421 = vunpack.c.l.b16 %v2385
        %v2422 = vunpack.c.l.b16 %v2386
        %v2423 = vpack.c.b16 %v2408, %v2407
        %v2424 = vpack.c.b16 %v2410, %v2409
        %v2425 = vpack.c.b16 %v2412, %v2411
        %v2426 = vpack.c.b16 %v2414, %v2413
        %v2427 = vpack.c.b16 %v2416, %v2415
        %v2428 = vpack.c.b16 %v2418, %v2417
        %v2429 = vpack.c.b16 %v2420, %v2419
        %v2430 = vpack.c.b16 %v2422, %v2421
        %2439 = vmatpush.bf16.msra.mxu0 %v2430
        %2440 = vmatpush.bf16.msra.mxu0 %v2429
        %2441 = vmatpush.bf16.msra.mxu0 %v2428
        %2442 = vmatpush.bf16.msra.mxu0 %v2427
        %2443 = vmatpush.bf16.msra.mxu0 %v2426
        %2444 = vmatpush.bf16.msra.mxu0 %v2425
        %2445 = vmatpush.bf16.msra.mxu0 %v2424
        %2446 = vmatpush.bf16.msra.mxu0 %v2423
        %2447 = vmatmul.bf16.gmra.mxu0 %v2363
        %v2448 = vpop.f32.mrf.mxu0
        %v2449 = vadd.f32 %v2389, %v2448
        %v2450 = vpop.f32.mrf.mxu0
        %v2451 = vadd.f32 %v2389, %v2450
        %2452 = vmatmul.bf16.gmra.mxu0 %v2364
        %v2453 = vpop.f32.mrf.mxu0
        %v2454 = vadd.f32 %v2389, %v2453
        %v2455 = vpop.f32.mrf.mxu0
        %v2456 = vadd.f32 %v2389, %v2455
        %2457 = vmatmul.bf16.gmra.mxu0 %v2365
        %v2458 = vpop.f32.mrf.mxu0
        %v2459 = vadd.f32 %v2389, %v2458
        %v2460 = vpop.f32.mrf.mxu0
        %v2461 = vadd.f32 %v2389, %v2460
        %2462 = vmatmul.bf16.gmra.mxu0 %v2366
        %v2463 = vpop.f32.mrf.mxu0
        %v2464 = vadd.f32 %v2389, %v2463
        %v2465 = vpop.f32.mrf.mxu0
        %v2466 = vadd.f32 %v2389, %v2465
        %2467 = vmatmul.bf16.gmra.mxu0 %v2367
        %v2468 = vpop.f32.mrf.mxu0
        %v2469 = vadd.f32 %v2389, %v2468
        %v2470 = vpop.f32.mrf.mxu0
        %v2471 = vadd.f32 %v2389, %v2470
        %2472 = vmatmul.bf16.gmra.mxu0 %v2368
        %v2473 = vpop.f32.mrf.mxu0
        %v2474 = vadd.f32 %v2389, %v2473
        %v2475 = vpop.f32.mrf.mxu0
        %v2476 = vadd.f32 %v2389, %v2475
        %2477 = vmatmul.bf16.gmra.mxu0 %v2369
        %v2478 = vpop.f32.mrf.mxu0
        %v2479 = vadd.f32 %v2389, %v2478
        %v2480 = vpop.f32.mrf.mxu0
        %v2481 = vadd.f32 %v2389, %v2480
        %2482 = vmatmul.bf16.gmra.mxu0 %v2370
        %v2483 = vpop.f32.mrf.mxu0
        %v2484 = vadd.f32 %v2389, %v2483
        %v2485 = vpop.f32.mrf.mxu0
        %v2486 = vadd.f32 %v2389, %v2485
        %2487 = vdwg.mxu0
        %2488 = vmax.xlane.f32.xlu0 %v2449
        %v2489 = vpop.xlane.xlu0 %2488
        %2490 = vmax.xlane.f32.xlu0 %v2451
        %v2491 = vpop.xlane.xlu0 %2490
        %2492 = vmax.xlane.f32.xlu0 %v2454
        %v2493 = vpop.xlane.xlu0 %2492
        %2494 = vmax.xlane.f32.xlu0 %v2456
        %v2495 = vpop.xlane.xlu0 %2494
        %2496 = vmax.xlane.f32.xlu0 %v2459
        %v2497 = vpop.xlane.xlu0 %2496
        %2498 = vmax.xlane.f32.xlu0 %v2461
        %v2499 = vpop.xlane.xlu0 %2498
        %2500 = vmax.xlane.f32.xlu0 %v2464
        %v2501 = vpop.xlane.xlu0 %2500
        %2502 = vmax.xlane.f32.xlu0 %v2466
        %v2503 = vpop.xlane.xlu0 %2502
        %2504 = vmax.xlane.f32.xlu0 %v2469
        %v2505 = vpop.xlane.xlu0 %2504
        %2506 = vmax.xlane.f32.xlu0 %v2471
        %v2507 = vpop.xlane.xlu0 %2506
        %2508 = vmax.xlane.f32.xlu0 %v2474
        %v2509 = vpop.xlane.xlu0 %2508
        %2510 = vmax.xlane.f32.xlu0 %v2476
        %v2511 = vpop.xlane.xlu0 %2510
        %2512 = vmax.xlane.f32.xlu0 %v2479
        %v2513 = vpop.xlane.xlu0 %2512
        %2514 = vmax.xlane.f32.xlu0 %v2481
        %v2515 = vpop.xlane.xlu0 %2514
        %2516 = vmax.xlane.f32.xlu0 %v2484
        %v2517 = vpop.xlane.xlu0 %2516
        %2518 = vmax.xlane.f32.xlu0 %v2486
        %v2519 = vpop.xlane.xlu0 %2518
        %v2520 = vsub.f32 %v2449, %v2489
        %v2521 = vsub.f32 %v2451, %v2491
        %v2522 = vsub.f32 %v2454, %v2493
        %v2523 = vsub.f32 %v2456, %v2495
        %v2524 = vsub.f32 %v2459, %v2497
        %v2525 = vsub.f32 %v2461, %v2499
        %v2526 = vsub.f32 %v2464, %v2501
        %v2527 = vsub.f32 %v2466, %v2503
        %v2528 = vsub.f32 %v2469, %v2505
        %v2529 = vsub.f32 %v2471, %v2507
        %v2530 = vsub.f32 %v2474, %v2509
        %v2531 = vsub.f32 %v2476, %v2511
        %v2532 = vsub.f32 %v2479, %v2513
        %v2533 = vsub.f32 %v2481, %v2515
        %v2534 = vsub.f32 %v2484, %v2517
        %v2535 = vsub.f32 %v2486, %v2519
        %v2536 = vmul.f32 %v2520, 1.442695
        %v2537 = vpow.pop %v2536
        %v2538 = vmul.f32 %v2521, 1.442695
        %v2539 = vpow.pop %v2538
        %v2540 = vmul.f32 %v2522, 1.442695
        %v2541 = vpow.pop %v2540
        %v2542 = vmul.f32 %v2523, 1.442695
        %v2543 = vpow.pop %v2542
        %v2544 = vmul.f32 %v2524, 1.442695
        %v2545 = vpow.pop %v2544
        %v2546 = vmul.f32 %v2525, 1.442695
        %v2547 = vpow.pop %v2546
        %v2548 = vmul.f32 %v2526, 1.442695
        %v2549 = vpow.pop %v2548
        %v2550 = vmul.f32 %v2527, 1.442695
        %v2551 = vpow.pop %v2550
        %v2552 = vmul.f32 %v2528, 1.442695
        %v2553 = vpow.pop %v2552
        %v2554 = vmul.f32 %v2529, 1.442695
        %v2555 = vpow.pop %v2554
        %v2556 = vmul.f32 %v2530, 1.442695
        %v2557 = vpow.pop %v2556
        %v2558 = vmul.f32 %v2531, 1.442695
        %v2559 = vpow.pop %v2558
        %v2560 = vmul.f32 %v2532, 1.442695
        %v2561 = vpow.pop %v2560
        %v2562 = vmul.f32 %v2533, 1.442695
        %v2563 = vpow.pop %v2562
        %v2564 = vmul.f32 %v2534, 1.442695
        %v2565 = vpow.pop %v2564
        %v2566 = vmul.f32 %v2535, 1.442695
        %v2567 = vpow.pop %v2566
        %2568 = vadd.xlane.f32.xlu0 %v2537
        %v2569 = vpop.xlane.xlu0 %2568
        %2570 = vadd.xlane.f32.xlu0 %v2539
        %v2571 = vpop.xlane.xlu0 %2570
        %2572 = vadd.xlane.f32.xlu0 %v2541
        %v2573 = vpop.xlane.xlu0 %2572
        %2574 = vadd.xlane.f32.xlu0 %v2543
        %v2575 = vpop.xlane.xlu0 %2574
        %2576 = vadd.xlane.f32.xlu0 %v2545
        %v2577 = vpop.xlane.xlu0 %2576
        %2578 = vadd.xlane.f32.xlu0 %v2547
        %v2579 = vpop.xlane.xlu0 %2578
        %2580 = vadd.xlane.f32.xlu0 %v2549
        %v2581 = vpop.xlane.xlu0 %2580
        %2582 = vadd.xlane.f32.xlu0 %v2551
        %v2583 = vpop.xlane.xlu0 %2582
        %2584 = vadd.xlane.f32.xlu0 %v2553
        %v2585 = vpop.xlane.xlu0 %2584
        %2586 = vadd.xlane.f32.xlu0 %v2555
        %v2587 = vpop.xlane.xlu0 %2586
        %2588 = vadd.xlane.f32.xlu0 %v2557
        %v2589 = vpop.xlane.xlu0 %2588
        %2590 = vadd.xlane.f32.xlu0 %v2559
        %v2591 = vpop.xlane.xlu0 %2590
        %2592 = vadd.xlane.f32.xlu0 %v2561
        %v2593 = vpop.xlane.xlu0 %2592
        %2594 = vadd.xlane.f32.xlu0 %v2563
        %v2595 = vpop.xlane.xlu0 %2594
        %2596 = vadd.xlane.f32.xlu0 %v2565
        %v2597 = vpop.xlane.xlu0 %2596
        %2598 = vadd.xlane.f32.xlu0 %v2567
        %v2599 = vpop.xlane.xlu0 %2598
        %v2600 = vlog2.pop %v2569
        %v2601 = vmul.f32 %v2600, 0.6931472
        %v2602 = vlog2.pop %v2571
        %v2603 = vmul.f32 %v2602, 0.6931472
        %v2604 = vlog2.pop %v2573
        %v2605 = vmul.f32 %v2604, 0.6931472
        %v2606 = vlog2.pop %v2575
        %v2607 = vmul.f32 %v2606, 0.6931472
        %v2608 = vlog2.pop %v2577
        %v2609 = vmul.f32 %v2608, 0.6931472
        %v2610 = vlog2.pop %v2579
        %v2611 = vmul.f32 %v2610, 0.6931472
        %v2612 = vlog2.pop %v2581
        %v2613 = vmul.f32 %v2612, 0.6931472
        %v2614 = vlog2.pop %v2583
        %v2615 = vmul.f32 %v2614, 0.6931472
        %v2616 = vlog2.pop %v2585
        %v2617 = vmul.f32 %v2616, 0.6931472
        %v2618 = vlog2.pop %v2587
        %v2619 = vmul.f32 %v2618, 0.6931472
        %v2620 = vlog2.pop %v2589
        %v2621 = vmul.f32 %v2620, 0.6931472
        %v2622 = vlog2.pop %v2591
        %v2623 = vmul.f32 %v2622, 0.6931472
        %v2624 = vlog2.pop %v2593
        %v2625 = vmul.f32 %v2624, 0.6931472
        %v2626 = vlog2.pop %v2595
        %v2627 = vmul.f32 %v2626, 0.6931472
        %v2628 = vlog2.pop %v2597
        %v2629 = vmul.f32 %v2628, 0.6931472
        %v2630 = vlog2.pop %v2599
        %v2631 = vmul.f32 %v2630, 0.6931472
        %v2632 = vsub.f32 %v2520, %v2601
        %v2633 = vsub.f32 %v2521, %v2603
        %v2634 = vsub.f32 %v2522, %v2605
        %v2635 = vsub.f32 %v2523, %v2607
        %v2636 = vsub.f32 %v2524, %v2609
        %v2637 = vsub.f32 %v2525, %v2611
        %v2638 = vsub.f32 %v2526, %v2613
        %v2639 = vsub.f32 %v2527, %v2615
        %v2640 = vsub.f32 %v2528, %v2617
        %v2641 = vsub.f32 %v2529, %v2619
        %v2642 = vsub.f32 %v2530, %v2621
        %v2643 = vsub.f32 %v2531, %v2623
        %v2644 = vsub.f32 %v2532, %v2625
        %v2645 = vsub.f32 %v2533, %v2627
        %v2646 = vsub.f32 %v2534, %v2629
        %v2647 = vsub.f32 %v2535, %v2631
        %2648 = vst [vmem:[%s442] sm:$0xff] %v2632
        %2649 = vst [vmem:[%s442 + $0x8] sm:$0xff] %v2633
        %2650 = vst [vmem:[%s442 + $0x10] sm:$0xff] %v2634
        %2651 = vst [vmem:[%s442 + $0x18] sm:$0xff] %v2635
        %2652 = vst [vmem:[%s442 + $0x20] sm:$0xff] %v2636
        %2653 = vst [vmem:[%s442 + $0x28] sm:$0xff] %v2637
        %2654 = vst [vmem:[%s442 + $0x30] sm:$0xff] %v2638
        %2655 = vst [vmem:[%s442 + $0x38] sm:$0xff] %v2639
        %2656 = vst [vmem:[%s442 + $0x40] sm:$0xff] %v2640
        %2657 = vst [vmem:[%s442 + $0x48] sm:$0xff] %v2641
        %2658 = vst [vmem:[%s442 + $0x50] sm:$0xff] %v2642
        %2659 = vst [vmem:[%s442 + $0x58] sm:$0xff] %v2643
        %2660 = vst [vmem:[%s442 + $0x60] sm:$0xff] %v2644
        %2661 = vst [vmem:[%s442 + $0x68] sm:$0xff] %v2645
        %2662 = vst [vmem:[%s442 + $0x70] sm:$0xff] %v2646
        %2663 = vst [vmem:[%s442 + $0x78] sm:$0xff] %v2647
        %s2664 = sand.u32 %s231, 1
        %s2665 = scalar_lea.sflag [#allocation4], %s2664
        %s2666 = sand.u32 %s231, 1
        %s2667 = smul.addr %s2666, 128
        %s2668 = scalar_lea.vmem [#allocation13], %s2667
        // Predicated region
        $region81: #{tpu_custom_call.1} parent=55 // pred_check
          %p2669 = pneg %p241
        $region82: #{tpu_custom_call.1} parent=55 // pred_check_branch
          %2671 = sbr.rel (%p2669) target = $region84
        $region83: #{tpu_custom_call.1} parent=55 // pred_region
          %s2672 = smul.u32 16, %s29
          %s2673 = ssub.s32 25, %s2672
          %p2674 = scmp.lt.s32.totalorder %s2673, 16
          %s2675 = scalar_select %p2674, %s2673, 16
          %s2676 = smul.u32 8, %s2675
          %s2677 = ssub.s32 128, %s2676
          %s2678 = sshll.u32 %s2677, 4
          %2679 = vsyncadd %s2665, %s2678
          %p2680 = scmp.ne.s32.totalorder 0, %s2676
          %s2681 = smul.addr %s2672, 8
          %s2682 = scalar_lea.hbm %s9, %s2681
          %s2683 = smul.u32 8, %s2675
          %s2684 = sshll.u32 %s2668, 4
          %s2685 = int_to_ptr.vmem [resolvable:$true] %s2684
          %s2686 = sshll.u32 %s2682, 4
          %s2687 = int_to_ptr.hbm [resolvable:$true] %s2686
          %s2688 = sshll.u32 %s2683, 4
          %2692 = dma.vmem_to_hbm [thread:$0]  (%p2680), %s2685, %s2688, %s2687, %s2665, 128, 128, 8
        $region84: #{tpu_custom_call.1} parent=55 // pred_fallthru
          _
      $region56: #{tpu_custom_call.1} parent=5 // pred_fallthru
        _
      %p2693 = scmp.le.s32.totalorder 2, %s24
      // Predicated region
      $region85: #{tpu_custom_call.1} parent=5 // pred_check
        %p2694 = pneg %p2693
      $region86: #{tpu_custom_call.1} parent=5 // pred_check_branch
        %2696 = sbr.rel (%p2694) target = $region88
      $region87: #{tpu_custom_call.1} parent=5 // pred_region
        %s2697 = ssub.s32 %s24, 2
        // Predicated region
        $region89: #{tpu_custom_call.1} parent=87 // pred_check
          %p2698 = pneg %p247
        $region90: #{tpu_custom_call.1} parent=87 // pred_check_branch
          %2700 = sbr.rel (%p2698) target = $region92
        $region91: #{tpu_custom_call.1} parent=87 // pred_region
          %s2701 = sand.u32 %s232, 1
          %s2702 = scalar_lea.sflag [#allocation4], %s2701
          %s2703 = sand.u32 %s232, 1
          %s2704 = smul.addr %s2703, 128
          %s2705 = scalar_lea.vmem [#allocation13], %s2704
          %2707 = dma.done %s2702, 2048
        $region92: #{tpu_custom_call.1} parent=87 // pred_fallthru
          _
      $region88: #{tpu_custom_call.1} parent=5 // pred_fallthru
        _
    $region6: #{tpu_custom_call.1} parent=1 // loop_footer
      %s28 = sadd.s32 1, %s24
    $region7: #{tpu_custom_call.1} parent=1 // loop_footer_branch
      %23 = sbr.rel target = $region3
    $region8: #{tpu_custom_call.1} parent=1 // loop_exit
      _
    %2708 = vsyncpa [#allocation3], 1
    %s2709 = scalar_lea.sflag [#allocation3], 1
    %2710 = vsyncpa %s2709, 1
    %2711 = vsyncpa [#allocation6], 1
    %2712 = vsyncpa [#allocation9], 1
    %2713 = vsyncpa [#allocation12], 1
    %2714 = vsyncpa [#allocation4], 1
    %s2715 = scalar_lea.sflag [#allocation4], 1
    %2716 = vsyncpa %s2715, 1

</llo_original>
